<compile_context>
chip_gen: v7x
topology: tpu7x:2x2x1
jax: 0.10.0
libtpu: 0.0.40
codegen_flags: <defaults>
</compile_context>

<pallas_src>
import functools
import math

import jax
import jax.numpy as jnp
from jax.experimental import pallas as pl
from jax.experimental.pallas import tpu as pltpu


def _mha_kernel(q_ref, k_ref, v_ref,
                wq_ref, bq_ref, wk_ref, bk_ref, wv_ref, bv_ref,
                wl_ref, bl_ref, o_ref,
                *, num_heads, hidden_dim):
    seq_q = q_ref.shape[0]

    # Stacked projections across ALL heads: [seq, in_dim] @ [in_dim, H*hidden].
    # Weights pre-transposed/pre-scaled on host; bf16 inputs, f32 accumulation.
    query_all = jnp.dot(q_ref[...], wq_ref[...],
                        preferred_element_type=jnp.float32) + bq_ref[...]
    key_all = jnp.dot(k_ref[...], wk_ref[...],
                      preferred_element_type=jnp.float32) + bk_ref[...]
    value_all = jnp.dot(v_ref[...], wv_ref[...],
                        preferred_element_type=jnp.float32) + bv_ref[...]
    value_bf16 = value_all.astype(jnp.bfloat16)

    # Per-head Q_h K_h^T (scale folded into Wq); contraction on dim 1 directly,
    # no transposes, lane-aligned slices. Statically unrolled (tiny trip count).
    scores_list = []
    for h in range(num_heads):
        lo = h * hidden_dim
        q_h = query_all[:, lo:lo + hidden_dim]      # [seq_q, hidden] f32
        k_h = key_all[:, lo:lo + hidden_dim]        # [seq_k, hidden] f32
        scores_list.append(
            jax.lax.dot_general(q_h, k_h, (((1,), (1,)), ((), ())),
                                preferred_element_type=jnp.float32))

    # Stack all heads along sublanes -> ONE batched softmax over the key axis.
    scores_all = jnp.concatenate(scores_list, axis=0)          # [H*seq_q, seq_k]
    scores_all = scores_all - jnp.max(scores_all, axis=-1, keepdims=True)
    e = jnp.exp(scores_all)
    probs_all = (e * pl.reciprocal(jnp.sum(e, axis=-1, keepdims=True),
                                   approx=True)).astype(jnp.bfloat16)

    # Per-head P@V; cast to bf16 inside the loop, concatenate bf16 head slabs.
    head_outs = []
    for h in range(num_heads):
        lo = h * hidden_dim
        p_h = probs_all[h * seq_q:(h + 1) * seq_q, :]   # [seq_q, seq_k] bf16
        v_h = value_bf16[:, lo:lo + hidden_dim]         # [seq_k, hidden] bf16
        head_outs.append(
            jnp.dot(p_h, v_h,
                    preferred_element_type=jnp.float32).astype(jnp.bfloat16))
    cat = jnp.concatenate(head_outs, axis=1)            # [seq_q, H*hidden] bf16

    # Final Linear as ONE K=512 matmul on the concatenated heads; bias added once.
    out = jnp.dot(cat, wl_ref[...],
                  preferred_element_type=jnp.float32) + bl_ref[...]
    o_ref[...] = out.astype(o_ref.dtype)

    # TODO(synk): optional `mask` argument (scores[mask==0] = -finfo.max) not
    # implemented; the forward under test uses mask=None.


def pack_mha_params(params, *, num_heads, hidden_dim, out_dim):
    """One-time host-side packing (call once, reuse across forwards).

    Per-head [H, hidden, in] weights -> stacked, pre-transposed [in, H*hidden]
    bf16 slabs; 1/sqrt(hidden_dim) folded into wq/bq; output weight transposed.
    """
    in_dim = params["wq"].shape[-1]
    hd = num_heads * hidden_dim
    inv_sqrt = 1.0 / math.sqrt(hidden_dim)

    def stack_heads(w):                       # [H, hidden, in] -> [in, H*hidden]
        return w.transpose(2, 0, 1).reshape(in_dim, hd)

    packed = {
        "wq": (stack_heads(params["wq"]) * inv_sqrt).astype(jnp.bfloat16),
        "bq": (params["bq"].reshape(1, hd) * inv_sqrt).astype(jnp.float32),
        "wk": stack_heads(params["wk"]).astype(jnp.bfloat16),
        "bk": params["bk"].reshape(1, hd).astype(jnp.float32),
        "wv": stack_heads(params["wv"]).astype(jnp.bfloat16),
        "bv": params["bv"].reshape(1, hd).astype(jnp.float32),
        "wl": params["wl"].T.astype(jnp.bfloat16),        # [H*hidden, out_dim]
        "bl": params["bl"].reshape(1, out_dim).astype(jnp.float32),
    }
    # Materialize now so no repacking work leaks into the forward path.
    return jax.tree_util.tree_map(jax.block_until_ready, packed)


@functools.partial(jax.jit, static_argnames=("num_heads", "hidden_dim", "out_dim"))
def multi_head_attention(q, k, v, packed, *, num_heads, hidden_dim, out_dim):
    """Pallas implementation of MultiHeadAttention.forward (mask=None).

    `packed` must come from pack_mha_params (pre-transposed bf16 weight slabs).
    """
    seq_q = q.shape[0]
    kernel = functools.partial(_mha_kernel,
                               num_heads=num_heads, hidden_dim=hidden_dim)

    vmem = pl.BlockSpec(memory_space=pltpu.MemorySpace.VMEM)

    return pl.pallas_call(
        kernel,
        out_shape=jax.ShapeDtypeStruct((seq_q, out_dim), jnp.float32),
        in_specs=[vmem] * 11,        # whole arrays resident in VMEM, no grid,
        out_specs=vmem,              # no pipeline prologue / double buffering
    )(q.astype(jnp.bfloat16), k.astype(jnp.bfloat16), v.astype(jnp.bfloat16),
      packed["wq"], packed["bq"], packed["wk"], packed["bk"],
      packed["wv"], packed["bv"], packed["wl"], packed["bl"])


def _reference(q, k, v, params, *, num_heads, hidden_dim, out_dim):
    """Pure-JAX f32 reference mirroring the PyTorch forward."""
    outs = []
    for h in range(num_heads):
        query = q @ params["wq"][h].T + params["bq"][h, 0]
        key = k @ params["wk"][h].T + params["bk"][h, 0]
        value = v @ params["wv"][h].T + params["bv"][h, 0]
        scores = (query @ key.T) / math.sqrt(hidden_dim)
        probs = jax.nn.softmax(scores, axis=1)
        outs.append(probs @ value)
    cat = jnp.concatenate(outs, axis=1)
    return cat @ params["wl"].T + params["bl"]


if __name__ == "__main__":
    # Module defaults: num_heads=8, in_dim=256, hidden_dim=64, out_dim=256.
    num_heads, in_dim, hidden_dim, out_dim = 8, 256, 64, 256
    seq = 8  # small sequence length

    key = jax.random.PRNGKey(0)
    ks = jax.random.split(key, 12)

    scale_p = 1.0 / math.sqrt(in_dim)
    scale_l = 1.0 / math.sqrt(num_heads * hidden_dim)
    params = {
        "wq": jax.random.uniform(ks[0], (num_heads, hidden_dim, in_dim), jnp.float32, -scale_p, scale_p),
        "bq": jax.random.uniform(ks[1], (num_heads, 1, hidden_dim), jnp.float32, -scale_p, scale_p),
        "wk": jax.random.uniform(ks[2], (num_heads, hidden_dim, in_dim), jnp.float32, -scale_p, scale_p),
        "bk": jax.random.uniform(ks[3], (num_heads, 1, hidden_dim), jnp.float32, -scale_p, scale_p),
        "wv": jax.random.uniform(ks[4], (num_heads, hidden_dim, in_dim), jnp.float32, -scale_p, scale_p),
        "bv": jax.random.uniform(ks[5], (num_heads, 1, hidden_dim), jnp.float32, -scale_p, scale_p),
        "wl": jax.random.uniform(ks[6], (out_dim, num_heads * hidden_dim), jnp.float32, -scale_l, scale_l),
        "bl": jax.random.uniform(ks[7], (out_dim,), jnp.float32, -scale_l, scale_l),
    }

    q = jax.random.normal(ks[8], (seq, in_dim), jnp.float32)
    k = jax.random.normal(ks[9], (seq, in_dim), jnp.float32)
    v = jax.random.normal(ks[10], (seq, in_dim), jnp.float32)

    # Pack weights ONCE (host-side layout plumbing; reused across forward calls).
    packed = pack_mha_params(params, num_heads=num_heads,
                             hidden_dim=hidden_dim, out_dim=out_dim)

    out = multi_head_attention(q, k, v, packed,
                               num_heads=num_heads, hidden_dim=hidden_dim,
                               out_dim=out_dim)
    out = jax.block_until_ready(out)

    ref = _reference(q, k, v, params,
                     num_heads=num_heads, hidden_dim=hidden_dim, out_dim=out_dim)
    assert out.shape == (seq, out_dim)
    # bf16 MXU inputs (f32 accumulation) + approx reciprocal -> relaxed tolerance.
    assert jnp.allclose(out, ref, atol=2e-2, rtol=2e-2), "mismatch vs JAX reference"

    print("KERNEL_OK")
</pallas_src>

<mosaic_0001>
module attributes {stable_mosaic.version = 11 : i64} {
  func.func @_mha_kernel(%arg0: memref<8x256xbf16, #tpu.memory_space<vmem>>, %arg1: memref<8x256xbf16, #tpu.memory_space<vmem>>, %arg2: memref<8x256xbf16, #tpu.memory_space<vmem>>, %arg3: memref<256x512xbf16, #tpu.memory_space<vmem>>, %arg4: memref<1x512xf32, #tpu.memory_space<vmem>>, %arg5: memref<256x512xbf16, #tpu.memory_space<vmem>>, %arg6: memref<1x512xf32, #tpu.memory_space<vmem>>, %arg7: memref<256x512xbf16, #tpu.memory_space<vmem>>, %arg8: memref<1x512xf32, #tpu.memory_space<vmem>>, %arg9: memref<512x256xbf16, #tpu.memory_space<vmem>>, %arg10: memref<1x256xf32, #tpu.memory_space<vmem>>, %arg11: memref<8x256xf32, #tpu.memory_space<vmem>>) attributes {dimension_semantics = [], scalar_prefetch = 0 : i64, scratch_operands = 0 : i64, tpu.core_type = #tpu.core_type<tc>} {
    %c0 = arith.constant 0 : index
    %c0_0 = arith.constant 0 : index
    %0 = vector.load %arg0[%c0, %c0_0] : memref<8x256xbf16, #tpu.memory_space<vmem>>, vector<8x256xbf16>
    %c0_1 = arith.constant 0 : index
    %c0_2 = arith.constant 0 : index
    %1 = vector.load %arg3[%c0_1, %c0_2] : memref<256x512xbf16, #tpu.memory_space<vmem>>, vector<256x512xbf16>
    %cst = arith.constant dense<0.000000e+00> : vector<8x512xf32>
    %2 = tpu.matmul %0, %1, %cst {dimension_numbers = #tpu.dot_dimension_numbers<[1], [0], [0], [1], [0, 0, 1, 1], [], []>} : vector<8x256xbf16>, vector<256x512xbf16>, vector<8x512xf32> -> vector<8x512xf32>
    %c0_3 = arith.constant 0 : index
    %c0_4 = arith.constant 0 : index
    %3 = vector.load %arg4[%c0_3, %c0_4] : memref<1x512xf32, #tpu.memory_space<vmem>>, vector<1x512xf32>
    %4 = vector.broadcast %3 : vector<1x512xf32> to vector<8x512xf32>
    %5 = arith.addf %2, %4 : vector<8x512xf32>
    %c0_5 = arith.constant 0 : index
    %c0_6 = arith.constant 0 : index
    %6 = vector.load %arg1[%c0_5, %c0_6] : memref<8x256xbf16, #tpu.memory_space<vmem>>, vector<8x256xbf16>
    %c0_7 = arith.constant 0 : index
    %c0_8 = arith.constant 0 : index
    %7 = vector.load %arg5[%c0_7, %c0_8] : memref<256x512xbf16, #tpu.memory_space<vmem>>, vector<256x512xbf16>
    %cst_9 = arith.constant dense<0.000000e+00> : vector<8x512xf32>
    %8 = tpu.matmul %6, %7, %cst_9 {dimension_numbers = #tpu.dot_dimension_numbers<[1], [0], [0], [1], [0, 0, 1, 1], [], []>} : vector<8x256xbf16>, vector<256x512xbf16>, vector<8x512xf32> -> vector<8x512xf32>
    %c0_10 = arith.constant 0 : index
    %c0_11 = arith.constant 0 : index
    %9 = vector.load %arg6[%c0_10, %c0_11] : memref<1x512xf32, #tpu.memory_space<vmem>>, vector<1x512xf32>
    %10 = vector.broadcast %9 : vector<1x512xf32> to vector<8x512xf32>
    %11 = arith.addf %8, %10 : vector<8x512xf32>
    %c0_12 = arith.constant 0 : index
    %c0_13 = arith.constant 0 : index
    %12 = vector.load %arg2[%c0_12, %c0_13] : memref<8x256xbf16, #tpu.memory_space<vmem>>, vector<8x256xbf16>
    %c0_14 = arith.constant 0 : index
    %c0_15 = arith.constant 0 : index
    %13 = vector.load %arg7[%c0_14, %c0_15] : memref<256x512xbf16, #tpu.memory_space<vmem>>, vector<256x512xbf16>
    %cst_16 = arith.constant dense<0.000000e+00> : vector<8x512xf32>
    %14 = tpu.matmul %12, %13, %cst_16 {dimension_numbers = #tpu.dot_dimension_numbers<[1], [0], [0], [1], [0, 0, 1, 1], [], []>} : vector<8x256xbf16>, vector<256x512xbf16>, vector<8x512xf32> -> vector<8x512xf32>
    %c0_17 = arith.constant 0 : index
    %c0_18 = arith.constant 0 : index
    %15 = vector.load %arg8[%c0_17, %c0_18] : memref<1x512xf32, #tpu.memory_space<vmem>>, vector<1x512xf32>
    %16 = vector.broadcast %15 : vector<1x512xf32> to vector<8x512xf32>
    %17 = arith.addf %14, %16 : vector<8x512xf32>
    %18 = arith.truncf %17 : vector<8x512xf32> to vector<8x512xbf16>
    %19 = vector.extract_strided_slice %5 {offsets = [0, 0], sizes = [8, 64], strides = [1, 1]} : vector<8x512xf32> to vector<8x64xf32>
    %20 = vector.extract_strided_slice %11 {offsets = [0, 0], sizes = [8, 64], strides = [1, 1]} : vector<8x512xf32> to vector<8x64xf32>
    %cst_19 = arith.constant dense<0.000000e+00> : vector<8x8xf32>
    %21 = tpu.matmul %19, %20, %cst_19 {dimension_numbers = #tpu.dot_dimension_numbers<[1], [1], [0], [0], [0, 0, 1, 0], [], []>} : vector<8x64xf32>, vector<8x64xf32>, vector<8x8xf32> -> vector<8x8xf32>
    %22 = vector.extract_strided_slice %5 {offsets = [0, 64], sizes = [8, 64], strides = [1, 1]} : vector<8x512xf32> to vector<8x64xf32>
    %23 = vector.extract_strided_slice %11 {offsets = [0, 64], sizes = [8, 64], strides = [1, 1]} : vector<8x512xf32> to vector<8x64xf32>
    %cst_20 = arith.constant dense<0.000000e+00> : vector<8x8xf32>
    %24 = tpu.matmul %22, %23, %cst_20 {dimension_numbers = #tpu.dot_dimension_numbers<[1], [1], [0], [0], [0, 0, 1, 0], [], []>} : vector<8x64xf32>, vector<8x64xf32>, vector<8x8xf32> -> vector<8x8xf32>
    %25 = vector.extract_strided_slice %5 {offsets = [0, 128], sizes = [8, 64], strides = [1, 1]} : vector<8x512xf32> to vector<8x64xf32>
    %26 = vector.extract_strided_slice %11 {offsets = [0, 128], sizes = [8, 64], strides = [1, 1]} : vector<8x512xf32> to vector<8x64xf32>
    %cst_21 = arith.constant dense<0.000000e+00> : vector<8x8xf32>
    %27 = tpu.matmul %25, %26, %cst_21 {dimension_numbers = #tpu.dot_dimension_numbers<[1], [1], [0], [0], [0, 0, 1, 0], [], []>} : vector<8x64xf32>, vector<8x64xf32>, vector<8x8xf32> -> vector<8x8xf32>
    %28 = vector.extract_strided_slice %5 {offsets = [0, 192], sizes = [8, 64], strides = [1, 1]} : vector<8x512xf32> to vector<8x64xf32>
    %29 = vector.extract_strided_slice %11 {offsets = [0, 192], sizes = [8, 64], strides = [1, 1]} : vector<8x512xf32> to vector<8x64xf32>
    %cst_22 = arith.constant dense<0.000000e+00> : vector<8x8xf32>
    %30 = tpu.matmul %28, %29, %cst_22 {dimension_numbers = #tpu.dot_dimension_numbers<[1], [1], [0], [0], [0, 0, 1, 0], [], []>} : vector<8x64xf32>, vector<8x64xf32>, vector<8x8xf32> -> vector<8x8xf32>
    %31 = vector.extract_strided_slice %5 {offsets = [0, 256], sizes = [8, 64], strides = [1, 1]} : vector<8x512xf32> to vector<8x64xf32>
    %32 = vector.extract_strided_slice %11 {offsets = [0, 256], sizes = [8, 64], strides = [1, 1]} : vector<8x512xf32> to vector<8x64xf32>
    %cst_23 = arith.constant dense<0.000000e+00> : vector<8x8xf32>
    %33 = tpu.matmul %31, %32, %cst_23 {dimension_numbers = #tpu.dot_dimension_numbers<[1], [1], [0], [0], [0, 0, 1, 0], [], []>} : vector<8x64xf32>, vector<8x64xf32>, vector<8x8xf32> -> vector<8x8xf32>
    %34 = vector.extract_strided_slice %5 {offsets = [0, 320], sizes = [8, 64], strides = [1, 1]} : vector<8x512xf32> to vector<8x64xf32>
    %35 = vector.extract_strided_slice %11 {offsets = [0, 320], sizes = [8, 64], strides = [1, 1]} : vector<8x512xf32> to vector<8x64xf32>
    %cst_24 = arith.constant dense<0.000000e+00> : vector<8x8xf32>
    %36 = tpu.matmul %34, %35, %cst_24 {dimension_numbers = #tpu.dot_dimension_numbers<[1], [1], [0], [0], [0, 0, 1, 0], [], []>} : vector<8x64xf32>, vector<8x64xf32>, vector<8x8xf32> -> vector<8x8xf32>
    %37 = vector.extract_strided_slice %5 {offsets = [0, 384], sizes = [8, 64], strides = [1, 1]} : vector<8x512xf32> to vector<8x64xf32>
    %38 = vector.extract_strided_slice %11 {offsets = [0, 384], sizes = [8, 64], strides = [1, 1]} : vector<8x512xf32> to vector<8x64xf32>
    %cst_25 = arith.constant dense<0.000000e+00> : vector<8x8xf32>
    %39 = tpu.matmul %37, %38, %cst_25 {dimension_numbers = #tpu.dot_dimension_numbers<[1], [1], [0], [0], [0, 0, 1, 0], [], []>} : vector<8x64xf32>, vector<8x64xf32>, vector<8x8xf32> -> vector<8x8xf32>
    %40 = vector.extract_strided_slice %5 {offsets = [0, 448], sizes = [8, 64], strides = [1, 1]} : vector<8x512xf32> to vector<8x64xf32>
    %41 = vector.extract_strided_slice %11 {offsets = [0, 448], sizes = [8, 64], strides = [1, 1]} : vector<8x512xf32> to vector<8x64xf32>
    %cst_26 = arith.constant dense<0.000000e+00> : vector<8x8xf32>
    %42 = tpu.matmul %40, %41, %cst_26 {dimension_numbers = #tpu.dot_dimension_numbers<[1], [1], [0], [0], [0, 0, 1, 0], [], []>} : vector<8x64xf32>, vector<8x64xf32>, vector<8x8xf32> -> vector<8x8xf32>
    %43 = tpu.concatenate %21, %24, %27, %30, %33, %36, %39, %42 in 0 : vector<8x8xf32>, vector<8x8xf32>, vector<8x8xf32>, vector<8x8xf32>, vector<8x8xf32>, vector<8x8xf32>, vector<8x8xf32>, vector<8x8xf32> -> vector<64x8xf32>
    %cst_27 = arith.constant dense<0xFF800000> : vector<64xf32>
    %44 = vector.multi_reduction <maximumf>, %43, %cst_27 [1] : vector<64x8xf32> to vector<64xf32>
    %45 = vector.shape_cast %44 : vector<64xf32> to vector<64x1xf32>
    %46 = vector.broadcast %45 : vector<64x1xf32> to vector<64x8xf32>
    %47 = arith.subf %43, %46 : vector<64x8xf32>
    %48 = math.exp %47 : vector<64x8xf32>
    %cst_28 = arith.constant dense<0.000000e+00> : vector<64xf32>
    %49 = vector.multi_reduction <add>, %48, %cst_28 [1] : vector<64x8xf32> to vector<64xf32>
    %50 = vector.shape_cast %49 : vector<64xf32> to vector<64x1xf32>
    %51 = tpu.reciprocal %50 {approx = true} : vector<64x1xf32> -> vector<64x1xf32>
    %52 = vector.broadcast %51 : vector<64x1xf32> to vector<64x8xf32>
    %53 = arith.mulf %48, %52 : vector<64x8xf32>
    %54 = arith.truncf %53 : vector<64x8xf32> to vector<64x8xbf16>
    %55 = vector.extract_strided_slice %54 {offsets = [0, 0], sizes = [8, 8], strides = [1, 1]} : vector<64x8xbf16> to vector<8x8xbf16>
    %56 = vector.extract_strided_slice %18 {offsets = [0, 0], sizes = [8, 64], strides = [1, 1]} : vector<8x512xbf16> to vector<8x64xbf16>
    %cst_29 = arith.constant dense<0.000000e+00> : vector<8x64xf32>
    %57 = tpu.matmul %55, %56, %cst_29 {dimension_numbers = #tpu.dot_dimension_numbers<[1], [0], [0], [1], [0, 0, 1, 1], [], []>} : vector<8x8xbf16>, vector<8x64xbf16>, vector<8x64xf32> -> vector<8x64xf32>
    %58 = arith.truncf %57 : vector<8x64xf32> to vector<8x64xbf16>
    %59 = vector.extract_strided_slice %54 {offsets = [8, 0], sizes = [8, 8], strides = [1, 1]} : vector<64x8xbf16> to vector<8x8xbf16>
    %60 = vector.extract_strided_slice %18 {offsets = [0, 64], sizes = [8, 64], strides = [1, 1]} : vector<8x512xbf16> to vector<8x64xbf16>
    %cst_30 = arith.constant dense<0.000000e+00> : vector<8x64xf32>
    %61 = tpu.matmul %59, %60, %cst_30 {dimension_numbers = #tpu.dot_dimension_numbers<[1], [0], [0], [1], [0, 0, 1, 1], [], []>} : vector<8x8xbf16>, vector<8x64xbf16>, vector<8x64xf32> -> vector<8x64xf32>
    %62 = arith.truncf %61 : vector<8x64xf32> to vector<8x64xbf16>
    %63 = vector.extract_strided_slice %54 {offsets = [16, 0], sizes = [8, 8], strides = [1, 1]} : vector<64x8xbf16> to vector<8x8xbf16>
    %64 = vector.extract_strided_slice %18 {offsets = [0, 128], sizes = [8, 64], strides = [1, 1]} : vector<8x512xbf16> to vector<8x64xbf16>
    %cst_31 = arith.constant dense<0.000000e+00> : vector<8x64xf32>
    %65 = tpu.matmul %63, %64, %cst_31 {dimension_numbers = #tpu.dot_dimension_numbers<[1], [0], [0], [1], [0, 0, 1, 1], [], []>} : vector<8x8xbf16>, vector<8x64xbf16>, vector<8x64xf32> -> vector<8x64xf32>
    %66 = arith.truncf %65 : vector<8x64xf32> to vector<8x64xbf16>
    %67 = vector.extract_strided_slice %54 {offsets = [24, 0], sizes = [8, 8], strides = [1, 1]} : vector<64x8xbf16> to vector<8x8xbf16>
    %68 = vector.extract_strided_slice %18 {offsets = [0, 192], sizes = [8, 64], strides = [1, 1]} : vector<8x512xbf16> to vector<8x64xbf16>
    %cst_32 = arith.constant dense<0.000000e+00> : vector<8x64xf32>
    %69 = tpu.matmul %67, %68, %cst_32 {dimension_numbers = #tpu.dot_dimension_numbers<[1], [0], [0], [1], [0, 0, 1, 1], [], []>} : vector<8x8xbf16>, vector<8x64xbf16>, vector<8x64xf32> -> vector<8x64xf32>
    %70 = arith.truncf %69 : vector<8x64xf32> to vector<8x64xbf16>
    %71 = vector.extract_strided_slice %54 {offsets = [32, 0], sizes = [8, 8], strides = [1, 1]} : vector<64x8xbf16> to vector<8x8xbf16>
    %72 = vector.extract_strided_slice %18 {offsets = [0, 256], sizes = [8, 64], strides = [1, 1]} : vector<8x512xbf16> to vector<8x64xbf16>
    %cst_33 = arith.constant dense<0.000000e+00> : vector<8x64xf32>
    %73 = tpu.matmul %71, %72, %cst_33 {dimension_numbers = #tpu.dot_dimension_numbers<[1], [0], [0], [1], [0, 0, 1, 1], [], []>} : vector<8x8xbf16>, vector<8x64xbf16>, vector<8x64xf32> -> vector<8x64xf32>
    %74 = arith.truncf %73 : vector<8x64xf32> to vector<8x64xbf16>
    %75 = vector.extract_strided_slice %54 {offsets = [40, 0], sizes = [8, 8], strides = [1, 1]} : vector<64x8xbf16> to vector<8x8xbf16>
    %76 = vector.extract_strided_slice %18 {offsets = [0, 320], sizes = [8, 64], strides = [1, 1]} : vector<8x512xbf16> to vector<8x64xbf16>
    %cst_34 = arith.constant dense<0.000000e+00> : vector<8x64xf32>
    %77 = tpu.matmul %75, %76, %cst_34 {dimension_numbers = #tpu.dot_dimension_numbers<[1], [0], [0], [1], [0, 0, 1, 1], [], []>} : vector<8x8xbf16>, vector<8x64xbf16>, vector<8x64xf32> -> vector<8x64xf32>
    %78 = arith.truncf %77 : vector<8x64xf32> to vector<8x64xbf16>
    %79 = vector.extract_strided_slice %54 {offsets = [48, 0], sizes = [8, 8], strides = [1, 1]} : vector<64x8xbf16> to vector<8x8xbf16>
    %80 = vector.extract_strided_slice %18 {offsets = [0, 384], sizes = [8, 64], strides = [1, 1]} : vector<8x512xbf16> to vector<8x64xbf16>
    %cst_35 = arith.constant dense<0.000000e+00> : vector<8x64xf32>
    %81 = tpu.matmul %79, %80, %cst_35 {dimension_numbers = #tpu.dot_dimension_numbers<[1], [0], [0], [1], [0, 0, 1, 1], [], []>} : vector<8x8xbf16>, vector<8x64xbf16>, vector<8x64xf32> -> vector<8x64xf32>
    %82 = arith.truncf %81 : vector<8x64xf32> to vector<8x64xbf16>
    %83 = vector.extract_strided_slice %54 {offsets = [56, 0], sizes = [8, 8], strides = [1, 1]} : vector<64x8xbf16> to vector<8x8xbf16>
    %84 = vector.extract_strided_slice %18 {offsets = [0, 448], sizes = [8, 64], strides = [1, 1]} : vector<8x512xbf16> to vector<8x64xbf16>
    %cst_36 = arith.constant dense<0.000000e+00> : vector<8x64xf32>
    %85 = tpu.matmul %83, %84, %cst_36 {dimension_numbers = #tpu.dot_dimension_numbers<[1], [0], [0], [1], [0, 0, 1, 1], [], []>} : vector<8x8xbf16>, vector<8x64xbf16>, vector<8x64xf32> -> vector<8x64xf32>
    %86 = arith.truncf %85 : vector<8x64xf32> to vector<8x64xbf16>
    %87 = tpu.concatenate %58, %62, %66, %70, %74, %78, %82, %86 in 1 : vector<8x64xbf16>, vector<8x64xbf16>, vector<8x64xbf16>, vector<8x64xbf16>, vector<8x64xbf16>, vector<8x64xbf16>, vector<8x64xbf16>, vector<8x64xbf16> -> vector<8x512xbf16>
    %c0_37 = arith.constant 0 : index
    %c0_38 = arith.constant 0 : index
    %88 = vector.load %arg9[%c0_37, %c0_38] : memref<512x256xbf16, #tpu.memory_space<vmem>>, vector<512x256xbf16>
    %cst_39 = arith.constant dense<0.000000e+00> : vector<8x256xf32>
    %89 = tpu.matmul %87, %88, %cst_39 {dimension_numbers = #tpu.dot_dimension_numbers<[1], [0], [0], [1], [0, 0, 1, 1], [], []>} : vector<8x512xbf16>, vector<512x256xbf16>, vector<8x256xf32> -> vector<8x256xf32>
    %c0_40 = arith.constant 0 : index
    %c0_41 = arith.constant 0 : index
    %90 = vector.load %arg10[%c0_40, %c0_41] : memref<1x256xf32, #tpu.memory_space<vmem>>, vector<1x256xf32>
    %91 = vector.broadcast %90 : vector<1x256xf32> to vector<8x256xf32>
    %92 = arith.addf %89, %91 : vector<8x256xf32>
    %c0_42 = arith.constant 0 : index
    %c0_43 = arith.constant 0 : index
    %93 = vector.load %arg11[%c0_42, %c0_43] : memref<8x256xf32, #tpu.memory_space<vmem>>, vector<8x256xf32>
    tpu.vector_store %arg11[%c0_42, %c0_43], %92 {strides = array<i32>} : memref<8x256xf32, #tpu.memory_space<vmem>>, vector<8x256xf32>,
    return
  }
}

</mosaic_0001>

<llo_original>
// kernel: multi_head_attention.1
$region0: #{multi_head_attention.1}
  #allocation0 [shape = 'u32[]', space=smem, size = 0x4, offset = 0x4, fixed_abs, tag = 'smem constant byte address 0x4 - core index']
  #allocation1 [shape = 'u32[144,128]{1,0:T(1,128)}', space=vmem, size = 0x12000, scoped, tag = 'internal scratch']
  %s0 = inlined_call_operand.vmem [shape: bf16[8,256], index: 0, kind: input, shape index: {}]
  %s1 = inlined_call_operand.vmem [shape: bf16[8,256], index: 1, kind: input, shape index: {}]
  %s2 = inlined_call_operand.vmem [shape: bf16[8,256], index: 2, kind: input, shape index: {}]
  %s3 = inlined_call_operand.hbm [shape: bf16[256,512], index: 3, kind: input, shape index: {}]
  %s4 = inlined_call_operand.vmem [shape: f32[1,512], index: 4, kind: input, shape index: {}]
  %s5 = inlined_call_operand.hbm [shape: bf16[256,512], index: 5, kind: input, shape index: {}]
  %s6 = inlined_call_operand.vmem [shape: f32[1,512], index: 6, kind: input, shape index: {}]
  %s7 = inlined_call_operand.hbm [shape: bf16[256,512], index: 7, kind: input, shape index: {}]
  %s8 = inlined_call_operand.vmem [shape: f32[1,512], index: 8, kind: input, shape index: {}]
  %s9 = inlined_call_operand.hbm [shape: bf16[512,256], index: 9, kind: input, shape index: {}]
  %s10 = inlined_call_operand.vmem [shape: f32[1,256], index: 10, kind: input, shape index: {}]
  %s11 = inlined_call_operand.hbm [shape: f32[8,256], index: 11, kind: output, shape index: {}]
  %s12 = sld [smem:[#allocation0]]
  $region70: #{multi_head_attention.1} parent=0
    _
  %s14 = ssub.s32 1, %s12
  %s15 = scalar_select 0, %s14, %s12
  $region1: #{multi_head_attention.1} parent=0
    #allocation2 [shape = 'u8[262144]{0}', space=vmem, size = 0x40000, scoped, tag = 'input window, operand 3, single buffered']
    #allocation3 [shape = 's32[1]{0}', space=sflag, size = 0x4, scoped, tag = 'scoped memory for multi_head_attention.1']
    #allocation4 [shape = 's32[1]{0}', space=sflag, size = 0x4, scoped, tag = 'scoped memory for multi_head_attention.1']
    #allocation5 [shape = 'u8[262144]{0}', space=vmem, size = 0x40000, scoped, tag = 'input window, operand 5, single buffered']
    #allocation6 [shape = 's32[1]{0}', space=sflag, size = 0x4, scoped, tag = 'scoped memory for multi_head_attention.1']
    #allocation7 [shape = 'u8[262144]{0}', space=vmem, size = 0x40000, scoped, tag = 'input window, operand 7, single buffered']
    #allocation8 [shape = 'u8[262144]{0}', space=vmem, size = 0x40000, scoped, tag = 'input window, operand 9, single buffered']
    #allocation9 [shape = 's32[1]{0}', space=sflag, size = 0x4, scoped, tag = 'scoped memory for multi_head_attention.1']
    #allocation10 [shape = 'u8[8192]{0}', space=vmem, size = 0x2000, scoped, tag = 'output window, operand 0, single buffered']
    %16 = vsyncpa [#allocation3], 0
    %17 = vsyncpa [#allocation6], 0
    %18 = vsyncpa [#allocation9], 0
    %19 = vsyncpa [#allocation4], 0
    // Predicated region
    $region2: #{multi_head_attention.1} parent=1 // pred_check
      _
    $region3: #{multi_head_attention.1} parent=1 // pred_check_branch
      %21 = sbr.rel (0) target = $region5
    $region4: #{multi_head_attention.1} parent=1 // pred_region
      _
    $region5: #{multi_head_attention.1} parent=1 // pred_fallthru
      _
    // Predicated region
    $region6: #{multi_head_attention.1} parent=1 // pred_check
      _
    $region7: #{multi_head_attention.1} parent=1 // pred_check_branch
      %23 = sbr.rel (0) target = $region9
    $region8: #{multi_head_attention.1} parent=1 // pred_region
      _
    $region9: #{multi_head_attention.1} parent=1 // pred_fallthru
      _
    // Predicated region
    $region10: #{multi_head_attention.1} parent=1 // pred_check
      _
    $region11: #{multi_head_attention.1} parent=1 // pred_check_branch
      %25 = sbr.rel (0) target = $region13
    $region12: #{multi_head_attention.1} parent=1 // pred_region
      _
    $region13: #{multi_head_attention.1} parent=1 // pred_fallthru
      _
    // Predicated region
    $region14: #{multi_head_attention.1} parent=1 // pred_check
      _
    $region15: #{multi_head_attention.1} parent=1 // pred_check_branch
      %27 = sbr.rel (0) target = $region17
    $region16: #{multi_head_attention.1} parent=1 // pred_region
      %s29 = ssub.s32 8192, 8192
      %30 = vsyncadd [#allocation3], %s29
      %s31 = sshll.u32 [#allocation2], 4
      %s32 = int_to_ptr.vmem [resolvable:$true] %s31
      %37 = dma.hbm_to_vmem [thread:$0]  %s3, 8192, %s32, [#allocation3], 256, 256, 16
    $region17: #{multi_head_attention.1} parent=1 // pred_fallthru
      _
    // Predicated region
    $region18: #{multi_head_attention.1} parent=1 // pred_check
      _
    $region19: #{multi_head_attention.1} parent=1 // pred_check_branch
      %39 = sbr.rel (0) target = $region21
    $region20: #{multi_head_attention.1} parent=1 // pred_region
      _
    $region21: #{multi_head_attention.1} parent=1 // pred_fallthru
      _
    // Predicated region
    $region22: #{multi_head_attention.1} parent=1 // pred_check
      _
    $region23: #{multi_head_attention.1} parent=1 // pred_check_branch
      %41 = sbr.rel (0) target = $region25
    $region24: #{multi_head_attention.1} parent=1 // pred_region
      %s43 = ssub.s32 8192, 8192
      %44 = vsyncadd [#allocation6], %s43
      %s45 = sshll.u32 [#allocation5], 4
      %s46 = int_to_ptr.vmem [resolvable:$true] %s45
      %51 = dma.hbm_to_vmem [thread:$0]  %s5, 8192, %s46, [#allocation6], 256, 256, 16
    $region25: #{multi_head_attention.1} parent=1 // pred_fallthru
      _
    // Predicated region
    $region26: #{multi_head_attention.1} parent=1 // pred_check
      _
    $region27: #{multi_head_attention.1} parent=1 // pred_check_branch
      %53 = sbr.rel (0) target = $region29
    $region28: #{multi_head_attention.1} parent=1 // pred_region
      _
    $region29: #{multi_head_attention.1} parent=1 // pred_fallthru
      _
    // Predicated region
    $region30: #{multi_head_attention.1} parent=1 // pred_check
      _
    $region31: #{multi_head_attention.1} parent=1 // pred_check_branch
      %55 = sbr.rel (0) target = $region33
    $region32: #{multi_head_attention.1} parent=1 // pred_region
      %s57 = ssub.s32 8192, 8192
      %58 = vsyncadd [#allocation6], %s57
      %s59 = sshll.u32 [#allocation7], 4
      %s60 = int_to_ptr.vmem [resolvable:$true] %s59
      %65 = dma.hbm_to_vmem [thread:$0]  %s7, 8192, %s60, [#allocation6], 256, 256, 16
    $region33: #{multi_head_attention.1} parent=1 // pred_fallthru
      _
    // Predicated region
    $region34: #{multi_head_attention.1} parent=1 // pred_check
      _
    $region35: #{multi_head_attention.1} parent=1 // pred_check_branch
      %67 = sbr.rel (0) target = $region37
    $region36: #{multi_head_attention.1} parent=1 // pred_region
      _
    $region37: #{multi_head_attention.1} parent=1 // pred_fallthru
      _
    // Predicated region
    $region38: #{multi_head_attention.1} parent=1 // pred_check
      _
    $region39: #{multi_head_attention.1} parent=1 // pred_check_branch
      %69 = sbr.rel (0) target = $region41
    $region40: #{multi_head_attention.1} parent=1 // pred_region
      %s71 = ssub.s32 8192, 8192
      %72 = vsyncadd [#allocation9], %s71
      %s73 = sshll.u32 [#allocation8], 4
      %s74 = int_to_ptr.vmem [resolvable:$true] %s73
      %79 = dma.hbm_to_vmem [thread:$0]  %s9, 8192, %s74, [#allocation9], 128, 128, 8
    $region41: #{multi_head_attention.1} parent=1 // pred_fallthru
      _
    // Predicated region
    $region42: #{multi_head_attention.1} parent=1 // pred_check
      _
    $region43: #{multi_head_attention.1} parent=1 // pred_check_branch
      %81 = sbr.rel (0) target = $region45
    $region44: #{multi_head_attention.1} parent=1 // pred_region
      _
    $region45: #{multi_head_attention.1} parent=1 // pred_fallthru
      _
    // Predicated region
    $region46: #{multi_head_attention.1} parent=1 // pred_check
      _
    $region47: #{multi_head_attention.1} parent=1 // pred_check_branch
      %83 = sbr.rel (0) target = $region49
    $region48: #{multi_head_attention.1} parent=1 // pred_region
      %84 = dma.done [#allocation3], 8192
    $region49: #{multi_head_attention.1} parent=1 // pred_fallthru
      _
    // Predicated region
    $region50: #{multi_head_attention.1} parent=1 // pred_check
      _
    $region51: #{multi_head_attention.1} parent=1 // pred_check_branch
      %86 = sbr.rel (0) target = $region53
    $region52: #{multi_head_attention.1} parent=1 // pred_region
      %87 = dma.done [#allocation6], 8192
    $region53: #{multi_head_attention.1} parent=1 // pred_fallthru
      _
    // Predicated region
    $region54: #{multi_head_attention.1} parent=1 // pred_check
      _
    $region55: #{multi_head_attention.1} parent=1 // pred_check_branch
      %89 = sbr.rel (0) target = $region57
    $region56: #{multi_head_attention.1} parent=1 // pred_region
      %90 = dma.done [#allocation6], 8192
    $region57: #{multi_head_attention.1} parent=1 // pred_fallthru
      _
    // Predicated region
    $region58: #{multi_head_attention.1} parent=1 // pred_check
      _
    $region59: #{multi_head_attention.1} parent=1 // pred_check_branch
      %92 = sbr.rel (0) target = $region61
    $region60: #{multi_head_attention.1} parent=1 // pred_region
      %93 = dma.done [#allocation9], 8192
    $region61: #{multi_head_attention.1} parent=1 // pred_fallthru
      _
    %v95 = vld [vmem:[%s0] sm:$0xff]
    %v96 = vld [vmem:[#allocation2] sm:$0xff]
    %v97 = vld [vmem:[#allocation2 + $0x8] sm:$0xff]
    %v98 = vld [vmem:[#allocation2 + $0x10] sm:$0xff]
    %v99 = vld [vmem:[#allocation2 + $0x18] sm:$0xff]
    %v100 = vld [vmem:[#allocation2 + $0x20] sm:$0xff]
    %v101 = vld [vmem:[#allocation2 + $0x28] sm:$0xff]
    %v102 = vld [vmem:[#allocation2 + $0x30] sm:$0xff]
    %v103 = vld [vmem:[#allocation2 + $0x38] sm:$0xff]
    %v104 = vld [vmem:[#allocation2 + $0x40] sm:$0xff]
    %v105 = vld [vmem:[#allocation2 + $0x48] sm:$0xff]
    %v106 = vld [vmem:[#allocation2 + $0x50] sm:$0xff]
    %v107 = vld [vmem:[#allocation2 + $0x58] sm:$0xff]
    %v108 = vld [vmem:[#allocation2 + $0x60] sm:$0xff]
    %v109 = vld [vmem:[#allocation2 + $0x68] sm:$0xff]
    %v110 = vld [vmem:[#allocation2 + $0x70] sm:$0xff]
    %v111 = vld [vmem:[#allocation2 + $0x78] sm:$0xff]
    %v112 = vld [vmem:[#allocation2 + $0x80] sm:$0xff]
    %v113 = vld [vmem:[#allocation2 + $0x88] sm:$0xff]
    %v114 = vld [vmem:[#allocation2 + $0x90] sm:$0xff]
    %v115 = vld [vmem:[#allocation2 + $0x98] sm:$0xff]
    %v116 = vld [vmem:[#allocation2 + $0xa0] sm:$0xff]
    %v117 = vld [vmem:[#allocation2 + $0xa8] sm:$0xff]
    %v118 = vld [vmem:[#allocation2 + $0xb0] sm:$0xff]
    %v119 = vld [vmem:[#allocation2 + $0xb8] sm:$0xff]
    %v120 = vld [vmem:[#allocation2 + $0xc0] sm:$0xff]
    %v121 = vld [vmem:[#allocation2 + $0xc8] sm:$0xff]
    %v122 = vld [vmem:[#allocation2 + $0xd0] sm:$0xff]
    %v123 = vld [vmem:[#allocation2 + $0xd8] sm:$0xff]
    %v124 = vld [vmem:[#allocation2 + $0xe0] sm:$0xff]
    %v125 = vld [vmem:[#allocation2 + $0xe8] sm:$0xff]
    %v126 = vld [vmem:[#allocation2 + $0xf0] sm:$0xff]
    %v127 = vld [vmem:[#allocation2 + $0xf8] sm:$0xff]
    %v128 = vld [vmem:[#allocation2 + $0x100] sm:$0xff]
    %v129 = vld [vmem:[#allocation2 + $0x108] sm:$0xff]
    %v130 = vld [vmem:[#allocation2 + $0x110] sm:$0xff]
    %v131 = vld [vmem:[#allocation2 + $0x118] sm:$0xff]
    %v132 = vld [vmem:[#allocation2 + $0x120] sm:$0xff]
    %v133 = vld [vmem:[#allocation2 + $0x128] sm:$0xff]
    %v134 = vld [vmem:[#allocation2 + $0x130] sm:$0xff]
    %v135 = vld [vmem:[#allocation2 + $0x138] sm:$0xff]
    %v136 = vld [vmem:[#allocation2 + $0x140] sm:$0xff]
    %v137 = vld [vmem:[#allocation2 + $0x148] sm:$0xff]
    %v138 = vld [vmem:[#allocation2 + $0x150] sm:$0xff]
    %v139 = vld [vmem:[#allocation2 + $0x158] sm:$0xff]
    %v140 = vld [vmem:[#allocation2 + $0x160] sm:$0xff]
    %v141 = vld [vmem:[#allocation2 + $0x168] sm:$0xff]
    %v142 = vld [vmem:[#allocation2 + $0x170] sm:$0xff]
    %v143 = vld [vmem:[#allocation2 + $0x178] sm:$0xff]
    %v144 = vld [vmem:[#allocation2 + $0x180] sm:$0xff]
    %v145 = vld [vmem:[#allocation2 + $0x188] sm:$0xff]
    %v146 = vld [vmem:[#allocation2 + $0x190] sm:$0xff]
    %v147 = vld [vmem:[#allocation2 + $0x198] sm:$0xff]
    %v148 = vld [vmem:[#allocation2 + $0x1a0] sm:$0xff]
    %v149 = vld [vmem:[#allocation2 + $0x1a8] sm:$0xff]
    %v150 = vld [vmem:[#allocation2 + $0x1b0] sm:$0xff]
    %v151 = vld [vmem:[#allocation2 + $0x1b8] sm:$0xff]
    %v152 = vld [vmem:[#allocation2 + $0x1c0] sm:$0xff]
    %v153 = vld [vmem:[#allocation2 + $0x1c8] sm:$0xff]
    %v154 = vld [vmem:[#allocation2 + $0x1d0] sm:$0xff]
    %v155 = vld [vmem:[#allocation2 + $0x1d8] sm:$0xff]
    %v156 = vld [vmem:[#allocation2 + $0x1e0] sm:$0xff]
    %v157 = vld [vmem:[#allocation2 + $0x1e8] sm:$0xff]
    %v158 = vld [vmem:[#allocation2 + $0x1f0] sm:$0xff]
    %v159 = vld [vmem:[#allocation2 + $0x1f8] sm:$0xff]
    %v160 = vld [vmem:[%s4] sm:$0xf]
    %v162 = vlaneseq
    %v163 = vshrl.u32 %v162, 7
    %v164 = vsub.s32 0, %v163
    %v165 = vrot.slane %v160, %v164
    %v166 = vlaneseq
    %v167 = vshrl.u32 %v166, 7
    %v168 = vsub.s32 1, %v167
    %v169 = vrot.slane %v160, %v168
    %v170 = vlaneseq
    %v171 = vshrl.u32 %v170, 7
    %v172 = vsub.s32 2, %v171
    %v173 = vrot.slane %v160, %v172
    %v174 = vlaneseq
    %v175 = vshrl.u32 %v174, 7
    %v176 = vsub.s32 3, %v175
    %v177 = vrot.slane %v160, %v176
    %v183 = vunpack.c.l.b16 %v95
    %v184 = vunpack.c.h.b16 %v95
    %v185 = vpack.c.b16 %v183, %v183
    %v186 = vpack.c.b16 %v184, %v184
    %v253 = vunpack.c.l.b16 %v96
    %v254 = vunpack.c.h.b16 %v96
    %v255 = vunpack.c.l.b16 %v97
    %v256 = vunpack.c.h.b16 %v97
    %v257 = vunpack.c.l.b16 %v98
    %v258 = vunpack.c.h.b16 %v98
    %v259 = vunpack.c.l.b16 %v99
    %v260 = vunpack.c.h.b16 %v99
    %v261 = vunpack.c.l.b16 %v100
    %v262 = vunpack.c.h.b16 %v100
    %v263 = vunpack.c.l.b16 %v101
    %v264 = vunpack.c.h.b16 %v101
    %v265 = vunpack.c.l.b16 %v102
    %v266 = vunpack.c.h.b16 %v102
    %v267 = vunpack.c.l.b16 %v103
    %v268 = vunpack.c.h.b16 %v103
    %v269 = vunpack.c.l.b16 %v104
    %v270 = vunpack.c.h.b16 %v104
    %v271 = vunpack.c.l.b16 %v105
    %v272 = vunpack.c.h.b16 %v105
    %v273 = vunpack.c.l.b16 %v106
    %v274 = vunpack.c.h.b16 %v106
    %v275 = vunpack.c.l.b16 %v107
    %v276 = vunpack.c.h.b16 %v107
    %v277 = vunpack.c.l.b16 %v108
    %v278 = vunpack.c.h.b16 %v108
    %v279 = vunpack.c.l.b16 %v109
    %v280 = vunpack.c.h.b16 %v109
    %v281 = vunpack.c.l.b16 %v110
    %v282 = vunpack.c.h.b16 %v110
    %v283 = vunpack.c.l.b16 %v111
    %v284 = vunpack.c.h.b16 %v111
    %v285 = vunpack.c.l.b16 %v112
    %v286 = vunpack.c.h.b16 %v112
    %v287 = vunpack.c.l.b16 %v113
    %v288 = vunpack.c.h.b16 %v113
    %v289 = vunpack.c.l.b16 %v114
    %v290 = vunpack.c.h.b16 %v114
    %v291 = vunpack.c.l.b16 %v115
    %v292 = vunpack.c.h.b16 %v115
    %v293 = vunpack.c.l.b16 %v116
    %v294 = vunpack.c.h.b16 %v116
    %v295 = vunpack.c.l.b16 %v117
    %v296 = vunpack.c.h.b16 %v117
    %v297 = vunpack.c.l.b16 %v118
    %v298 = vunpack.c.h.b16 %v118
    %v299 = vunpack.c.l.b16 %v119
    %v300 = vunpack.c.h.b16 %v119
    %v301 = vunpack.c.l.b16 %v120
    %v302 = vunpack.c.h.b16 %v120
    %v303 = vunpack.c.l.b16 %v121
    %v304 = vunpack.c.h.b16 %v121
    %v305 = vunpack.c.l.b16 %v122
    %v306 = vunpack.c.h.b16 %v122
    %v307 = vunpack.c.l.b16 %v123
    %v308 = vunpack.c.h.b16 %v123
    %v309 = vunpack.c.l.b16 %v124
    %v310 = vunpack.c.h.b16 %v124
    %v311 = vunpack.c.l.b16 %v125
    %v312 = vunpack.c.h.b16 %v125
    %v313 = vunpack.c.l.b16 %v126
    %v314 = vunpack.c.h.b16 %v126
    %v315 = vunpack.c.l.b16 %v127
    %v316 = vunpack.c.h.b16 %v127
    %v317 = vunpack.c.l.b16 %v128
    %v318 = vunpack.c.h.b16 %v128
    %v319 = vunpack.c.l.b16 %v129
    %v320 = vunpack.c.h.b16 %v129
    %v321 = vunpack.c.l.b16 %v130
    %v322 = vunpack.c.h.b16 %v130
    %v323 = vunpack.c.l.b16 %v131
    %v324 = vunpack.c.h.b16 %v131
    %v325 = vunpack.c.l.b16 %v132
    %v326 = vunpack.c.h.b16 %v132
    %v327 = vunpack.c.l.b16 %v133
    %v328 = vunpack.c.h.b16 %v133
    %v329 = vunpack.c.l.b16 %v134
    %v330 = vunpack.c.h.b16 %v134
    %v331 = vunpack.c.l.b16 %v135
    %v332 = vunpack.c.h.b16 %v135
    %v333 = vunpack.c.l.b16 %v136
    %v334 = vunpack.c.h.b16 %v136
    %v335 = vunpack.c.l.b16 %v137
    %v336 = vunpack.c.h.b16 %v137
    %v337 = vunpack.c.l.b16 %v138
    %v338 = vunpack.c.h.b16 %v138
    %v339 = vunpack.c.l.b16 %v139
    %v340 = vunpack.c.h.b16 %v139
    %v341 = vunpack.c.l.b16 %v140
    %v342 = vunpack.c.h.b16 %v140
    %v343 = vunpack.c.l.b16 %v141
    %v344 = vunpack.c.h.b16 %v141
    %v345 = vunpack.c.l.b16 %v142
    %v346 = vunpack.c.h.b16 %v142
    %v347 = vunpack.c.l.b16 %v143
    %v348 = vunpack.c.h.b16 %v143
    %v349 = vunpack.c.l.b16 %v144
    %v350 = vunpack.c.h.b16 %v144
    %v351 = vunpack.c.l.b16 %v145
    %v352 = vunpack.c.h.b16 %v145
    %v353 = vunpack.c.l.b16 %v146
    %v354 = vunpack.c.h.b16 %v146
    %v355 = vunpack.c.l.b16 %v147
    %v356 = vunpack.c.h.b16 %v147
    %v357 = vunpack.c.l.b16 %v148
    %v358 = vunpack.c.h.b16 %v148
    %v359 = vunpack.c.l.b16 %v149
    %v360 = vunpack.c.h.b16 %v149
    %v361 = vunpack.c.l.b16 %v150
    %v362 = vunpack.c.h.b16 %v150
    %v363 = vunpack.c.l.b16 %v151
    %v364 = vunpack.c.h.b16 %v151
    %v365 = vunpack.c.l.b16 %v152
    %v366 = vunpack.c.h.b16 %v152
    %v367 = vunpack.c.l.b16 %v153
    %v368 = vunpack.c.h.b16 %v153
    %v369 = vunpack.c.l.b16 %v154
    %v370 = vunpack.c.h.b16 %v154
    %v371 = vunpack.c.l.b16 %v155
    %v372 = vunpack.c.h.b16 %v155
    %v373 = vunpack.c.l.b16 %v156
    %v374 = vunpack.c.h.b16 %v156
    %v375 = vunpack.c.l.b16 %v157
    %v376 = vunpack.c.h.b16 %v157
    %v377 = vunpack.c.l.b16 %v158
    %v378 = vunpack.c.h.b16 %v158
    %v379 = vunpack.c.l.b16 %v159
    %v380 = vunpack.c.h.b16 %v159
    %v381 = vpack.c.b16 %v257, %v253
    %v382 = vpack.c.b16 %v258, %v254
    %v383 = vpack.c.b16 %v259, %v255
    %v384 = vpack.c.b16 %v260, %v256
    %v385 = vpack.c.b16 %v265, %v261
    %v386 = vpack.c.b16 %v266, %v262
    %v387 = vpack.c.b16 %v267, %v263
    %v388 = vpack.c.b16 %v268, %v264
    %v389 = vpack.c.b16 %v273, %v269
    %v390 = vpack.c.b16 %v274, %v270
    %v391 = vpack.c.b16 %v275, %v271
    %v392 = vpack.c.b16 %v276, %v272
    %v393 = vpack.c.b16 %v281, %v277
    %v394 = vpack.c.b16 %v282, %v278
    %v395 = vpack.c.b16 %v283, %v279
    %v396 = vpack.c.b16 %v284, %v280
    %v397 = vpack.c.b16 %v289, %v285
    %v398 = vpack.c.b16 %v290, %v286
    %v399 = vpack.c.b16 %v291, %v287
    %v400 = vpack.c.b16 %v292, %v288
    %v401 = vpack.c.b16 %v297, %v293
    %v402 = vpack.c.b16 %v298, %v294
    %v403 = vpack.c.b16 %v299, %v295
    %v404 = vpack.c.b16 %v300, %v296
    %v405 = vpack.c.b16 %v305, %v301
    %v406 = vpack.c.b16 %v306, %v302
    %v407 = vpack.c.b16 %v307, %v303
    %v408 = vpack.c.b16 %v308, %v304
    %v409 = vpack.c.b16 %v313, %v309
    %v410 = vpack.c.b16 %v314, %v310
    %v411 = vpack.c.b16 %v315, %v311
    %v412 = vpack.c.b16 %v316, %v312
    %v413 = vpack.c.b16 %v321, %v317
    %v414 = vpack.c.b16 %v322, %v318
    %v415 = vpack.c.b16 %v323, %v319
    %v416 = vpack.c.b16 %v324, %v320
    %v417 = vpack.c.b16 %v329, %v325
    %v418 = vpack.c.b16 %v330, %v326
    %v419 = vpack.c.b16 %v331, %v327
    %v420 = vpack.c.b16 %v332, %v328
    %v421 = vpack.c.b16 %v337, %v333
    %v422 = vpack.c.b16 %v338, %v334
    %v423 = vpack.c.b16 %v339, %v335
    %v424 = vpack.c.b16 %v340, %v336
    %v425 = vpack.c.b16 %v345, %v341
    %v426 = vpack.c.b16 %v346, %v342
    %v427 = vpack.c.b16 %v347, %v343
    %v428 = vpack.c.b16 %v348, %v344
    %v429 = vpack.c.b16 %v353, %v349
    %v430 = vpack.c.b16 %v354, %v350
    %v431 = vpack.c.b16 %v355, %v351
    %v432 = vpack.c.b16 %v356, %v352
    %v433 = vpack.c.b16 %v361, %v357
    %v434 = vpack.c.b16 %v362, %v358
    %v435 = vpack.c.b16 %v363, %v359
    %v436 = vpack.c.b16 %v364, %v360
    %v437 = vpack.c.b16 %v369, %v365
    %v438 = vpack.c.b16 %v370, %v366
    %v439 = vpack.c.b16 %v371, %v367
    %v440 = vpack.c.b16 %v372, %v368
    %v441 = vpack.c.b16 %v377, %v373
    %v442 = vpack.c.b16 %v378, %v374
    %v443 = vpack.c.b16 %v379, %v375
    %v444 = vpack.c.b16 %v380, %v376
    %509 = vmatprep.subr.bf16.mxu0 %v382
    %510 = vmatpush1.bf16.msra.mxu0 %v381
    %511 = vmatprep.subr.bf16.mxu0 %v386
    %512 = vmatpush1.bf16.msra.mxu0 %v385
    %513 = vmatprep.subr.bf16.mxu0 %v390
    %514 = vmatpush1.bf16.msra.mxu0 %v389
    %515 = vmatprep.subr.bf16.mxu0 %v394
    %516 = vmatpush1.bf16.msra.mxu0 %v393
    %517 = vmatprep.subr.bf16.mxu0 %v398
    %518 = vmatpush1.bf16.msra.mxu0 %v397
    %519 = vmatprep.subr.bf16.mxu0 %v402
    %520 = vmatpush1.bf16.msra.mxu0 %v401
    %521 = vmatprep.subr.bf16.mxu0 %v406
    %522 = vmatpush1.bf16.msra.mxu0 %v405
    %523 = vmatprep.subr.bf16.mxu0 %v410
    %524 = vmatpush1.bf16.msra.mxu0 %v409
    %525 = vmatprep.subr.bf16.mxu0 %v414
    %526 = vmatpush1.bf16.msra.mxu0 %v413
    %527 = vmatprep.subr.bf16.mxu0 %v418
    %528 = vmatpush1.bf16.msra.mxu0 %v417
    %529 = vmatprep.subr.bf16.mxu0 %v422
    %530 = vmatpush1.bf16.msra.mxu0 %v421
    %531 = vmatprep.subr.bf16.mxu0 %v426
    %532 = vmatpush1.bf16.msra.mxu0 %v425
    %533 = vmatprep.subr.bf16.mxu0 %v430
    %534 = vmatpush1.bf16.msra.mxu0 %v429
    %535 = vmatprep.subr.bf16.mxu0 %v434
    %536 = vmatpush1.bf16.msra.mxu0 %v433
    %537 = vmatprep.subr.bf16.mxu0 %v438
    %538 = vmatpush1.bf16.msra.mxu0 %v437
    %539 = vmatprep.subr.bf16.mxu0 %v442
    %540 = vmatpush1.bf16.msra.mxu0 %v441
    %541 = vmatprep.mubr.bf16.mxu0 %v186
    %542 = vmatmul.mubr.bf16.gmra.mrb[0].mxu0 %v185
    %v543 = vpop.f32.mrb[0].mxu0
    %v544 = vadd.f32 %v165, %v543
    %v545 = vpop.f32.mrb[0].mxu0
    %v546 = vadd.f32 %v169, %v545
    %v547 = vpop.f32.mrb[0].mxu0
    %v548 = vpop.f32.mrb[0].mxu0
    %549 = vdwg.mxu0
    %550 = vmatprep.subr.bf16.mxu0 %v384
    %551 = vmatpush1.bf16.msra.mxu0 %v383
    %552 = vmatprep.subr.bf16.mxu0 %v388
    %553 = vmatpush1.bf16.msra.mxu0 %v387
    %554 = vmatprep.subr.bf16.mxu0 %v392
    %555 = vmatpush1.bf16.msra.mxu0 %v391
    %556 = vmatprep.subr.bf16.mxu0 %v396
    %557 = vmatpush1.bf16.msra.mxu0 %v395
    %558 = vmatprep.subr.bf16.mxu0 %v400
    %559 = vmatpush1.bf16.msra.mxu0 %v399
    %560 = vmatprep.subr.bf16.mxu0 %v404
    %561 = vmatpush1.bf16.msra.mxu0 %v403
    %562 = vmatprep.subr.bf16.mxu0 %v408
    %563 = vmatpush1.bf16.msra.mxu0 %v407
    %564 = vmatprep.subr.bf16.mxu0 %v412
    %565 = vmatpush1.bf16.msra.mxu0 %v411
    %566 = vmatprep.subr.bf16.mxu0 %v416
    %567 = vmatpush1.bf16.msra.mxu0 %v415
    %568 = vmatprep.subr.bf16.mxu0 %v420
    %569 = vmatpush1.bf16.msra.mxu0 %v419
    %570 = vmatprep.subr.bf16.mxu0 %v424
    %571 = vmatpush1.bf16.msra.mxu0 %v423
    %572 = vmatprep.subr.bf16.mxu0 %v428
    %573 = vmatpush1.bf16.msra.mxu0 %v427
    %574 = vmatprep.subr.bf16.mxu0 %v432
    %575 = vmatpush1.bf16.msra.mxu0 %v431
    %576 = vmatprep.subr.bf16.mxu0 %v436
    %577 = vmatpush1.bf16.msra.mxu0 %v435
    %578 = vmatprep.subr.bf16.mxu0 %v440
    %579 = vmatpush1.bf16.msra.mxu0 %v439
    %580 = vmatprep.subr.bf16.mxu0 %v444
    %581 = vmatpush1.bf16.msra.mxu0 %v443
    %582 = vmatprep.mubr.bf16.mxu0 %v186
    %583 = vmatmul.mubr.bf16.gmra.mrb[0].mxu0 %v185
    %v584 = vpop.f32.mrb[0].mxu0
    %v585 = vadd.f32 %v173, %v584
    %v586 = vpop.f32.mrb[0].mxu0
    %v587 = vadd.f32 %v177, %v586
    %v588 = vpop.f32.mrb[0].mxu0
    %v589 = vpop.f32.mrb[0].mxu0
    %590 = vdwg.mxu0
    %v591 = vld [vmem:[%s1] sm:$0xff]
    %v592 = vld [vmem:[#allocation5] sm:$0xff]
    %v593 = vld [vmem:[#allocation5 + $0x8] sm:$0xff]
    %v594 = vld [vmem:[#allocation5 + $0x10] sm:$0xff]
    %v595 = vld [vmem:[#allocation5 + $0x18] sm:$0xff]
    %v596 = vld [vmem:[#allocation5 + $0x20] sm:$0xff]
    %v597 = vld [vmem:[#allocation5 + $0x28] sm:$0xff]
    %v598 = vld [vmem:[#allocation5 + $0x30] sm:$0xff]
    %v599 = vld [vmem:[#allocation5 + $0x38] sm:$0xff]
    %v600 = vld [vmem:[#allocation5 + $0x40] sm:$0xff]
    %v601 = vld [vmem:[#allocation5 + $0x48] sm:$0xff]
    %v602 = vld [vmem:[#allocation5 + $0x50] sm:$0xff]
    %v603 = vld [vmem:[#allocation5 + $0x58] sm:$0xff]
    %v604 = vld [vmem:[#allocation5 + $0x60] sm:$0xff]
    %v605 = vld [vmem:[#allocation5 + $0x68] sm:$0xff]
    %v606 = vld [vmem:[#allocation5 + $0x70] sm:$0xff]
    %v607 = vld [vmem:[#allocation5 + $0x78] sm:$0xff]
    %v608 = vld [vmem:[#allocation5 + $0x80] sm:$0xff]
    %v609 = vld [vmem:[#allocation5 + $0x88] sm:$0xff]
    %v610 = vld [vmem:[#allocation5 + $0x90] sm:$0xff]
    %v611 = vld [vmem:[#allocation5 + $0x98] sm:$0xff]
    %v612 = vld [vmem:[#allocation5 + $0xa0] sm:$0xff]
    %v613 = vld [vmem:[#allocation5 + $0xa8] sm:$0xff]
    %v614 = vld [vmem:[#allocation5 + $0xb0] sm:$0xff]
    %v615 = vld [vmem:[#allocation5 + $0xb8] sm:$0xff]
    %v616 = vld [vmem:[#allocation5 + $0xc0] sm:$0xff]
    %v617 = vld [vmem:[#allocation5 + $0xc8] sm:$0xff]
    %v618 = vld [vmem:[#allocation5 + $0xd0] sm:$0xff]
    %v619 = vld [vmem:[#allocation5 + $0xd8] sm:$0xff]
    %v620 = vld [vmem:[#allocation5 + $0xe0] sm:$0xff]
    %v621 = vld [vmem:[#allocation5 + $0xe8] sm:$0xff]
    %v622 = vld [vmem:[#allocation5 + $0xf0] sm:$0xff]
    %v623 = vld [vmem:[#allocation5 + $0xf8] sm:$0xff]
    %v624 = vld [vmem:[#allocation5 + $0x100] sm:$0xff]
    %v625 = vld [vmem:[#allocation5 + $0x108] sm:$0xff]
    %v626 = vld [vmem:[#allocation5 + $0x110] sm:$0xff]
    %v627 = vld [vmem:[#allocation5 + $0x118] sm:$0xff]
    %v628 = vld [vmem:[#allocation5 + $0x120] sm:$0xff]
    %v629 = vld [vmem:[#allocation5 + $0x128] sm:$0xff]
    %v630 = vld [vmem:[#allocation5 + $0x130] sm:$0xff]
    %v631 = vld [vmem:[#allocation5 + $0x138] sm:$0xff]
    %v632 = vld [vmem:[#allocation5 + $0x140] sm:$0xff]
    %v633 = vld [vmem:[#allocation5 + $0x148] sm:$0xff]
    %v634 = vld [vmem:[#allocation5 + $0x150] sm:$0xff]
    %v635 = vld [vmem:[#allocation5 + $0x158] sm:$0xff]
    %v636 = vld [vmem:[#allocation5 + $0x160] sm:$0xff]
    %v637 = vld [vmem:[#allocation5 + $0x168] sm:$0xff]
    %v638 = vld [vmem:[#allocation5 + $0x170] sm:$0xff]
    %v639 = vld [vmem:[#allocation5 + $0x178] sm:$0xff]
    %v640 = vld [vmem:[#allocation5 + $0x180] sm:$0xff]
    %v641 = vld [vmem:[#allocation5 + $0x188] sm:$0xff]
    %v642 = vld [vmem:[#allocation5 + $0x190] sm:$0xff]
    %v643 = vld [vmem:[#allocation5 + $0x198] sm:$0xff]
    %v644 = vld [vmem:[#allocation5 + $0x1a0] sm:$0xff]
    %v645 = vld [vmem:[#allocation5 + $0x1a8] sm:$0xff]
    %v646 = vld [vmem:[#allocation5 + $0x1b0] sm:$0xff]
    %v647 = vld [vmem:[#allocation5 + $0x1b8] sm:$0xff]
    %v648 = vld [vmem:[#allocation5 + $0x1c0] sm:$0xff]
    %v649 = vld [vmem:[#allocation5 + $0x1c8] sm:$0xff]
    %v650 = vld [vmem:[#allocation5 + $0x1d0] sm:$0xff]
    %v651 = vld [vmem:[#allocation5 + $0x1d8] sm:$0xff]
    %v652 = vld [vmem:[#allocation5 + $0x1e0] sm:$0xff]
    %v653 = vld [vmem:[#allocation5 + $0x1e8] sm:$0xff]
    %v654 = vld [vmem:[#allocation5 + $0x1f0] sm:$0xff]
    %v655 = vld [vmem:[#allocation5 + $0x1f8] sm:$0xff]
    %v656 = vld [vmem:[%s6] sm:$0xf]
    %v658 = vlaneseq
    %v659 = vshrl.u32 %v658, 7
    %v660 = vsub.s32 0, %v659
    %v661 = vrot.slane %v656, %v660
    %v662 = vlaneseq
    %v663 = vshrl.u32 %v662, 7
    %v664 = vsub.s32 1, %v663
    %v665 = vrot.slane %v656, %v664
    %v666 = vlaneseq
    %v667 = vshrl.u32 %v666, 7
    %v668 = vsub.s32 2, %v667
    %v669 = vrot.slane %v656, %v668
    %v670 = vlaneseq
    %v671 = vshrl.u32 %v670, 7
    %v672 = vsub.s32 3, %v671
    %v673 = vrot.slane %v656, %v672
    %v679 = vunpack.c.l.b16 %v591
    %v680 = vunpack.c.h.b16 %v591
    %v681 = vpack.c.b16 %v679, %v679
    %v682 = vpack.c.b16 %v680, %v680
    %v749 = vunpack.c.l.b16 %v592
    %v750 = vunpack.c.h.b16 %v592
    %v751 = vunpack.c.l.b16 %v593
    %v752 = vunpack.c.h.b16 %v593
    %v753 = vunpack.c.l.b16 %v594
    %v754 = vunpack.c.h.b16 %v594
    %v755 = vunpack.c.l.b16 %v595
    %v756 = vunpack.c.h.b16 %v595
    %v757 = vunpack.c.l.b16 %v596
    %v758 = vunpack.c.h.b16 %v596
    %v759 = vunpack.c.l.b16 %v597
    %v760 = vunpack.c.h.b16 %v597
    %v761 = vunpack.c.l.b16 %v598
    %v762 = vunpack.c.h.b16 %v598
    %v763 = vunpack.c.l.b16 %v599
    %v764 = vunpack.c.h.b16 %v599
    %v765 = vunpack.c.l.b16 %v600
    %v766 = vunpack.c.h.b16 %v600
    %v767 = vunpack.c.l.b16 %v601
    %v768 = vunpack.c.h.b16 %v601
    %v769 = vunpack.c.l.b16 %v602
    %v770 = vunpack.c.h.b16 %v602
    %v771 = vunpack.c.l.b16 %v603
    %v772 = vunpack.c.h.b16 %v603
    %v773 = vunpack.c.l.b16 %v604
    %v774 = vunpack.c.h.b16 %v604
    %v775 = vunpack.c.l.b16 %v605
    %v776 = vunpack.c.h.b16 %v605
    %v777 = vunpack.c.l.b16 %v606
    %v778 = vunpack.c.h.b16 %v606
    %v779 = vunpack.c.l.b16 %v607
    %v780 = vunpack.c.h.b16 %v607
    %v781 = vunpack.c.l.b16 %v608
    %v782 = vunpack.c.h.b16 %v608
    %v783 = vunpack.c.l.b16 %v609
    %v784 = vunpack.c.h.b16 %v609
    %v785 = vunpack.c.l.b16 %v610
    %v786 = vunpack.c.h.b16 %v610
    %v787 = vunpack.c.l.b16 %v611
    %v788 = vunpack.c.h.b16 %v611
    %v789 = vunpack.c.l.b16 %v612
    %v790 = vunpack.c.h.b16 %v612
    %v791 = vunpack.c.l.b16 %v613
    %v792 = vunpack.c.h.b16 %v613
    %v793 = vunpack.c.l.b16 %v614
    %v794 = vunpack.c.h.b16 %v614
    %v795 = vunpack.c.l.b16 %v615
    %v796 = vunpack.c.h.b16 %v615
    %v797 = vunpack.c.l.b16 %v616
    %v798 = vunpack.c.h.b16 %v616
    %v799 = vunpack.c.l.b16 %v617
    %v800 = vunpack.c.h.b16 %v617
    %v801 = vunpack.c.l.b16 %v618
    %v802 = vunpack.c.h.b16 %v618
    %v803 = vunpack.c.l.b16 %v619
    %v804 = vunpack.c.h.b16 %v619
    %v805 = vunpack.c.l.b16 %v620
    %v806 = vunpack.c.h.b16 %v620
    %v807 = vunpack.c.l.b16 %v621
    %v808 = vunpack.c.h.b16 %v621
    %v809 = vunpack.c.l.b16 %v622
    %v810 = vunpack.c.h.b16 %v622
    %v811 = vunpack.c.l.b16 %v623
    %v812 = vunpack.c.h.b16 %v623
    %v813 = vunpack.c.l.b16 %v624
    %v814 = vunpack.c.h.b16 %v624
    %v815 = vunpack.c.l.b16 %v625
    %v816 = vunpack.c.h.b16 %v625
    %v817 = vunpack.c.l.b16 %v626
    %v818 = vunpack.c.h.b16 %v626
    %v819 = vunpack.c.l.b16 %v627
    %v820 = vunpack.c.h.b16 %v627
    %v821 = vunpack.c.l.b16 %v628
    %v822 = vunpack.c.h.b16 %v628
    %v823 = vunpack.c.l.b16 %v629
    %v824 = vunpack.c.h.b16 %v629
    %v825 = vunpack.c.l.b16 %v630
    %v826 = vunpack.c.h.b16 %v630
    %v827 = vunpack.c.l.b16 %v631
    %v828 = vunpack.c.h.b16 %v631
    %v829 = vunpack.c.l.b16 %v632
    %v830 = vunpack.c.h.b16 %v632
    %v831 = vunpack.c.l.b16 %v633
    %v832 = vunpack.c.h.b16 %v633
    %v833 = vunpack.c.l.b16 %v634
    %v834 = vunpack.c.h.b16 %v634
    %v835 = vunpack.c.l.b16 %v635
    %v836 = vunpack.c.h.b16 %v635
    %v837 = vunpack.c.l.b16 %v636
    %v838 = vunpack.c.h.b16 %v636
    %v839 = vunpack.c.l.b16 %v637
    %v840 = vunpack.c.h.b16 %v637
    %v841 = vunpack.c.l.b16 %v638
    %v842 = vunpack.c.h.b16 %v638
    %v843 = vunpack.c.l.b16 %v639
    %v844 = vunpack.c.h.b16 %v639
    %v845 = vunpack.c.l.b16 %v640
    %v846 = vunpack.c.h.b16 %v640
    %v847 = vunpack.c.l.b16 %v641
    %v848 = vunpack.c.h.b16 %v641
    %v849 = vunpack.c.l.b16 %v642
    %v850 = vunpack.c.h.b16 %v642
    %v851 = vunpack.c.l.b16 %v643
    %v852 = vunpack.c.h.b16 %v643
    %v853 = vunpack.c.l.b16 %v644
    %v854 = vunpack.c.h.b16 %v644
    %v855 = vunpack.c.l.b16 %v645
    %v856 = vunpack.c.h.b16 %v645
    %v857 = vunpack.c.l.b16 %v646
    %v858 = vunpack.c.h.b16 %v646
    %v859 = vunpack.c.l.b16 %v647
    %v860 = vunpack.c.h.b16 %v647
    %v861 = vunpack.c.l.b16 %v648
    %v862 = vunpack.c.h.b16 %v648
    %v863 = vunpack.c.l.b16 %v649
    %v864 = vunpack.c.h.b16 %v649
    %v865 = vunpack.c.l.b16 %v650
    %v866 = vunpack.c.h.b16 %v650
    %v867 = vunpack.c.l.b16 %v651
    %v868 = vunpack.c.h.b16 %v651
    %v869 = vunpack.c.l.b16 %v652
    %v870 = vunpack.c.h.b16 %v652
    %v871 = vunpack.c.l.b16 %v653
    %v872 = vunpack.c.h.b16 %v653
    %v873 = vunpack.c.l.b16 %v654
    %v874 = vunpack.c.h.b16 %v654
    %v875 = vunpack.c.l.b16 %v655
    %v876 = vunpack.c.h.b16 %v655
    %v877 = vpack.c.b16 %v753, %v749
    %v878 = vpack.c.b16 %v754, %v750
    %v879 = vpack.c.b16 %v755, %v751
    %v880 = vpack.c.b16 %v756, %v752
    %v881 = vpack.c.b16 %v761, %v757
    %v882 = vpack.c.b16 %v762, %v758
    %v883 = vpack.c.b16 %v763, %v759
    %v884 = vpack.c.b16 %v764, %v760
    %v885 = vpack.c.b16 %v769, %v765
    %v886 = vpack.c.b16 %v770, %v766
    %v887 = vpack.c.b16 %v771, %v767
    %v888 = vpack.c.b16 %v772, %v768
    %v889 = vpack.c.b16 %v777, %v773
    %v890 = vpack.c.b16 %v778, %v774
    %v891 = vpack.c.b16 %v779, %v775
    %v892 = vpack.c.b16 %v780, %v776
    %v893 = vpack.c.b16 %v785, %v781
    %v894 = vpack.c.b16 %v786, %v782
    %v895 = vpack.c.b16 %v787, %v783
    %v896 = vpack.c.b16 %v788, %v784
    %v897 = vpack.c.b16 %v793, %v789
    %v898 = vpack.c.b16 %v794, %v790
    %v899 = vpack.c.b16 %v795, %v791
    %v900 = vpack.c.b16 %v796, %v792
    %v901 = vpack.c.b16 %v801, %v797
    %v902 = vpack.c.b16 %v802, %v798
    %v903 = vpack.c.b16 %v803, %v799
    %v904 = vpack.c.b16 %v804, %v800
    %v905 = vpack.c.b16 %v809, %v805
    %v906 = vpack.c.b16 %v810, %v806
    %v907 = vpack.c.b16 %v811, %v807
    %v908 = vpack.c.b16 %v812, %v808
    %v909 = vpack.c.b16 %v817, %v813
    %v910 = vpack.c.b16 %v818, %v814
    %v911 = vpack.c.b16 %v819, %v815
    %v912 = vpack.c.b16 %v820, %v816
    %v913 = vpack.c.b16 %v825, %v821
    %v914 = vpack.c.b16 %v826, %v822
    %v915 = vpack.c.b16 %v827, %v823
    %v916 = vpack.c.b16 %v828, %v824
    %v917 = vpack.c.b16 %v833, %v829
    %v918 = vpack.c.b16 %v834, %v830
    %v919 = vpack.c.b16 %v835, %v831
    %v920 = vpack.c.b16 %v836, %v832
    %v921 = vpack.c.b16 %v841, %v837
    %v922 = vpack.c.b16 %v842, %v838
    %v923 = vpack.c.b16 %v843, %v839
    %v924 = vpack.c.b16 %v844, %v840
    %v925 = vpack.c.b16 %v849, %v845
    %v926 = vpack.c.b16 %v850, %v846
    %v927 = vpack.c.b16 %v851, %v847
    %v928 = vpack.c.b16 %v852, %v848
    %v929 = vpack.c.b16 %v857, %v853
    %v930 = vpack.c.b16 %v858, %v854
    %v931 = vpack.c.b16 %v859, %v855
    %v932 = vpack.c.b16 %v860, %v856
    %v933 = vpack.c.b16 %v865, %v861
    %v934 = vpack.c.b16 %v866, %v862
    %v935 = vpack.c.b16 %v867, %v863
    %v936 = vpack.c.b16 %v868, %v864
    %v937 = vpack.c.b16 %v873, %v869
    %v938 = vpack.c.b16 %v874, %v870
    %v939 = vpack.c.b16 %v875, %v871
    %v940 = vpack.c.b16 %v876, %v872
    %1005 = vmatprep.subr.bf16.mxu0 %v878
    %1006 = vmatpush1.bf16.msra.mxu0 %v877
    %1007 = vmatprep.subr.bf16.mxu0 %v882
    %1008 = vmatpush1.bf16.msra.mxu0 %v881
    %1009 = vmatprep.subr.bf16.mxu0 %v886
    %1010 = vmatpush1.bf16.msra.mxu0 %v885
    %1011 = vmatprep.subr.bf16.mxu0 %v890
    %1012 = vmatpush1.bf16.msra.mxu0 %v889
    %1013 = vmatprep.subr.bf16.mxu0 %v894
    %1014 = vmatpush1.bf16.msra.mxu0 %v893
    %1015 = vmatprep.subr.bf16.mxu0 %v898
    %1016 = vmatpush1.bf16.msra.mxu0 %v897
    %1017 = vmatprep.subr.bf16.mxu0 %v902
    %1018 = vmatpush1.bf16.msra.mxu0 %v901
    %1019 = vmatprep.subr.bf16.mxu0 %v906
    %1020 = vmatpush1.bf16.msra.mxu0 %v905
    %1021 = vmatprep.subr.bf16.mxu0 %v910
    %1022 = vmatpush1.bf16.msra.mxu0 %v909
    %1023 = vmatprep.subr.bf16.mxu0 %v914
    %1024 = vmatpush1.bf16.msra.mxu0 %v913
    %1025 = vmatprep.subr.bf16.mxu0 %v918
    %1026 = vmatpush1.bf16.msra.mxu0 %v917
    %1027 = vmatprep.subr.bf16.mxu0 %v922
    %1028 = vmatpush1.bf16.msra.mxu0 %v921
    %1029 = vmatprep.subr.bf16.mxu0 %v926
    %1030 = vmatpush1.bf16.msra.mxu0 %v925
    %1031 = vmatprep.subr.bf16.mxu0 %v930
    %1032 = vmatpush1.bf16.msra.mxu0 %v929
    %1033 = vmatprep.subr.bf16.mxu0 %v934
    %1034 = vmatpush1.bf16.msra.mxu0 %v933
    %1035 = vmatprep.subr.bf16.mxu0 %v938
    %1036 = vmatpush1.bf16.msra.mxu0 %v937
    %1037 = vmatprep.mubr.bf16.mxu0 %v682
    %1038 = vmatmul.mubr.bf16.gmra.mrb[0].mxu0 %v681
    %v1039 = vpop.f32.mrb[0].mxu0
    %v1040 = vadd.f32 %v661, %v1039
    %v1041 = vpop.f32.mrb[0].mxu0
    %v1042 = vadd.f32 %v665, %v1041
    %v1043 = vpop.f32.mrb[0].mxu0
    %v1044 = vpop.f32.mrb[0].mxu0
    %1045 = vdwg.mxu0
    %1046 = vmatprep.subr.bf16.mxu0 %v880
    %1047 = vmatpush1.bf16.msra.mxu0 %v879
    %1048 = vmatprep.subr.bf16.mxu0 %v884
    %1049 = vmatpush1.bf16.msra.mxu0 %v883
    %1050 = vmatprep.subr.bf16.mxu0 %v888
    %1051 = vmatpush1.bf16.msra.mxu0 %v887
    %1052 = vmatprep.subr.bf16.mxu0 %v892
    %1053 = vmatpush1.bf16.msra.mxu0 %v891
    %1054 = vmatprep.subr.bf16.mxu0 %v896
    %1055 = vmatpush1.bf16.msra.mxu0 %v895
    %1056 = vmatprep.subr.bf16.mxu0 %v900
    %1057 = vmatpush1.bf16.msra.mxu0 %v899
    %1058 = vmatprep.subr.bf16.mxu0 %v904
    %1059 = vmatpush1.bf16.msra.mxu0 %v903
    %1060 = vmatprep.subr.bf16.mxu0 %v908
    %1061 = vmatpush1.bf16.msra.mxu0 %v907
    %1062 = vmatprep.subr.bf16.mxu0 %v912
    %1063 = vmatpush1.bf16.msra.mxu0 %v911
    %1064 = vmatprep.subr.bf16.mxu0 %v916
    %1065 = vmatpush1.bf16.msra.mxu0 %v915
    %1066 = vmatprep.subr.bf16.mxu0 %v920
    %1067 = vmatpush1.bf16.msra.mxu0 %v919
    %1068 = vmatprep.subr.bf16.mxu0 %v924
    %1069 = vmatpush1.bf16.msra.mxu0 %v923
    %1070 = vmatprep.subr.bf16.mxu0 %v928
    %1071 = vmatpush1.bf16.msra.mxu0 %v927
    %1072 = vmatprep.subr.bf16.mxu0 %v932
    %1073 = vmatpush1.bf16.msra.mxu0 %v931
    %1074 = vmatprep.subr.bf16.mxu0 %v936
    %1075 = vmatpush1.bf16.msra.mxu0 %v935
    %1076 = vmatprep.subr.bf16.mxu0 %v940
    %1077 = vmatpush1.bf16.msra.mxu0 %v939
    %1078 = vmatprep.mubr.bf16.mxu0 %v682
    %1079 = vmatmul.mubr.bf16.gmra.mrb[0].mxu0 %v681
    %v1080 = vpop.f32.mrb[0].mxu0
    %v1081 = vadd.f32 %v669, %v1080
    %v1082 = vpop.f32.mrb[0].mxu0
    %v1083 = vadd.f32 %v673, %v1082
    %v1084 = vpop.f32.mrb[0].mxu0
    %v1085 = vpop.f32.mrb[0].mxu0
    %1086 = vdwg.mxu0
    %v1087 = vld [vmem:[%s2] sm:$0xff]
    %v1088 = vld [vmem:[#allocation7] sm:$0xff]
    %v1089 = vld [vmem:[#allocation7 + $0x8] sm:$0xff]
    %v1090 = vld [vmem:[#allocation7 + $0x10] sm:$0xff]
    %v1091 = vld [vmem:[#allocation7 + $0x18] sm:$0xff]
    %v1092 = vld [vmem:[#allocation7 + $0x20] sm:$0xff]
    %v1093 = vld [vmem:[#allocation7 + $0x28] sm:$0xff]
    %v1094 = vld [vmem:[#allocation7 + $0x30] sm:$0xff]
    %v1095 = vld [vmem:[#allocation7 + $0x38] sm:$0xff]
    %v1096 = vld [vmem:[#allocation7 + $0x40] sm:$0xff]
    %v1097 = vld [vmem:[#allocation7 + $0x48] sm:$0xff]
    %v1098 = vld [vmem:[#allocation7 + $0x50] sm:$0xff]
    %v1099 = vld [vmem:[#allocation7 + $0x58] sm:$0xff]
    %v1100 = vld [vmem:[#allocation7 + $0x60] sm:$0xff]
    %v1101 = vld [vmem:[#allocation7 + $0x68] sm:$0xff]
    %v1102 = vld [vmem:[#allocation7 + $0x70] sm:$0xff]
    %v1103 = vld [vmem:[#allocation7 + $0x78] sm:$0xff]
    %v1104 = vld [vmem:[#allocation7 + $0x80] sm:$0xff]
    %v1105 = vld [vmem:[#allocation7 + $0x88] sm:$0xff]
    %v1106 = vld [vmem:[#allocation7 + $0x90] sm:$0xff]
    %v1107 = vld [vmem:[#allocation7 + $0x98] sm:$0xff]
    %v1108 = vld [vmem:[#allocation7 + $0xa0] sm:$0xff]
    %v1109 = vld [vmem:[#allocation7 + $0xa8] sm:$0xff]
    %v1110 = vld [vmem:[#allocation7 + $0xb0] sm:$0xff]
    %v1111 = vld [vmem:[#allocation7 + $0xb8] sm:$0xff]
    %v1112 = vld [vmem:[#allocation7 + $0xc0] sm:$0xff]
    %v1113 = vld [vmem:[#allocation7 + $0xc8] sm:$0xff]
    %v1114 = vld [vmem:[#allocation7 + $0xd0] sm:$0xff]
    %v1115 = vld [vmem:[#allocation7 + $0xd8] sm:$0xff]
    %v1116 = vld [vmem:[#allocation7 + $0xe0] sm:$0xff]
    %v1117 = vld [vmem:[#allocation7 + $0xe8] sm:$0xff]
    %v1118 = vld [vmem:[#allocation7 + $0xf0] sm:$0xff]
    %v1119 = vld [vmem:[#allocation7 + $0xf8] sm:$0xff]
    %v1120 = vld [vmem:[#allocation7 + $0x100] sm:$0xff]
    %v1121 = vld [vmem:[#allocation7 + $0x108] sm:$0xff]
    %v1122 = vld [vmem:[#allocation7 + $0x110] sm:$0xff]
    %v1123 = vld [vmem:[#allocation7 + $0x118] sm:$0xff]
    %v1124 = vld [vmem:[#allocation7 + $0x120] sm:$0xff]
    %v1125 = vld [vmem:[#allocation7 + $0x128] sm:$0xff]
    %v1126 = vld [vmem:[#allocation7 + $0x130] sm:$0xff]
    %v1127 = vld [vmem:[#allocation7 + $0x138] sm:$0xff]
    %v1128 = vld [vmem:[#allocation7 + $0x140] sm:$0xff]
    %v1129 = vld [vmem:[#allocation7 + $0x148] sm:$0xff]
    %v1130 = vld [vmem:[#allocation7 + $0x150] sm:$0xff]
    %v1131 = vld [vmem:[#allocation7 + $0x158] sm:$0xff]
    %v1132 = vld [vmem:[#allocation7 + $0x160] sm:$0xff]
    %v1133 = vld [vmem:[#allocation7 + $0x168] sm:$0xff]
    %v1134 = vld [vmem:[#allocation7 + $0x170] sm:$0xff]
    %v1135 = vld [vmem:[#allocation7 + $0x178] sm:$0xff]
    %v1136 = vld [vmem:[#allocation7 + $0x180] sm:$0xff]
    %v1137 = vld [vmem:[#allocation7 + $0x188] sm:$0xff]
    %v1138 = vld [vmem:[#allocation7 + $0x190] sm:$0xff]
    %v1139 = vld [vmem:[#allocation7 + $0x198] sm:$0xff]
    %v1140 = vld [vmem:[#allocation7 + $0x1a0] sm:$0xff]
    %v1141 = vld [vmem:[#allocation7 + $0x1a8] sm:$0xff]
    %v1142 = vld [vmem:[#allocation7 + $0x1b0] sm:$0xff]
    %v1143 = vld [vmem:[#allocation7 + $0x1b8] sm:$0xff]
    %v1144 = vld [vmem:[#allocation7 + $0x1c0] sm:$0xff]
    %v1145 = vld [vmem:[#allocation7 + $0x1c8] sm:$0xff]
    %v1146 = vld [vmem:[#allocation7 + $0x1d0] sm:$0xff]
    %v1147 = vld [vmem:[#allocation7 + $0x1d8] sm:$0xff]
    %v1148 = vld [vmem:[#allocation7 + $0x1e0] sm:$0xff]
    %v1149 = vld [vmem:[#allocation7 + $0x1e8] sm:$0xff]
    %v1150 = vld [vmem:[#allocation7 + $0x1f0] sm:$0xff]
    %v1151 = vld [vmem:[#allocation7 + $0x1f8] sm:$0xff]
    %v1152 = vld [vmem:[%s8] sm:$0xf]
    %v1154 = vlaneseq
    %v1155 = vshrl.u32 %v1154, 7
    %v1156 = vsub.s32 0, %v1155
    %v1157 = vrot.slane %v1152, %v1156
    %v1158 = vlaneseq
    %v1159 = vshrl.u32 %v1158, 7
    %v1160 = vsub.s32 1, %v1159
    %v1161 = vrot.slane %v1152, %v1160
    %v1162 = vlaneseq
    %v1163 = vshrl.u32 %v1162, 7
    %v1164 = vsub.s32 2, %v1163
    %v1165 = vrot.slane %v1152, %v1164
    %v1166 = vlaneseq
    %v1167 = vshrl.u32 %v1166, 7
    %v1168 = vsub.s32 3, %v1167
    %v1169 = vrot.slane %v1152, %v1168
    %v1175 = vunpack.c.l.b16 %v1087
    %v1176 = vunpack.c.h.b16 %v1087
    %v1177 = vpack.c.b16 %v1175, %v1175
    %v1178 = vpack.c.b16 %v1176, %v1176
    %v1245 = vunpack.c.l.b16 %v1088
    %v1246 = vunpack.c.h.b16 %v1088
    %v1247 = vunpack.c.l.b16 %v1089
    %v1248 = vunpack.c.h.b16 %v1089
    %v1249 = vunpack.c.l.b16 %v1090
    %v1250 = vunpack.c.h.b16 %v1090
    %v1251 = vunpack.c.l.b16 %v1091
    %v1252 = vunpack.c.h.b16 %v1091
    %v1253 = vunpack.c.l.b16 %v1092
    %v1254 = vunpack.c.h.b16 %v1092
    %v1255 = vunpack.c.l.b16 %v1093
    %v1256 = vunpack.c.h.b16 %v1093
    %v1257 = vunpack.c.l.b16 %v1094
    %v1258 = vunpack.c.h.b16 %v1094
    %v1259 = vunpack.c.l.b16 %v1095
    %v1260 = vunpack.c.h.b16 %v1095
    %v1261 = vunpack.c.l.b16 %v1096
    %v1262 = vunpack.c.h.b16 %v1096
    %v1263 = vunpack.c.l.b16 %v1097
    %v1264 = vunpack.c.h.b16 %v1097
    %v1265 = vunpack.c.l.b16 %v1098
    %v1266 = vunpack.c.h.b16 %v1098
    %v1267 = vunpack.c.l.b16 %v1099
    %v1268 = vunpack.c.h.b16 %v1099
    %v1269 = vunpack.c.l.b16 %v1100
    %v1270 = vunpack.c.h.b16 %v1100
    %v1271 = vunpack.c.l.b16 %v1101
    %v1272 = vunpack.c.h.b16 %v1101
    %v1273 = vunpack.c.l.b16 %v1102
    %v1274 = vunpack.c.h.b16 %v1102
    %v1275 = vunpack.c.l.b16 %v1103
    %v1276 = vunpack.c.h.b16 %v1103
    %v1277 = vunpack.c.l.b16 %v1104
    %v1278 = vunpack.c.h.b16 %v1104
    %v1279 = vunpack.c.l.b16 %v1105
    %v1280 = vunpack.c.h.b16 %v1105
    %v1281 = vunpack.c.l.b16 %v1106
    %v1282 = vunpack.c.h.b16 %v1106
    %v1283 = vunpack.c.l.b16 %v1107
    %v1284 = vunpack.c.h.b16 %v1107
    %v1285 = vunpack.c.l.b16 %v1108
    %v1286 = vunpack.c.h.b16 %v1108
    %v1287 = vunpack.c.l.b16 %v1109
    %v1288 = vunpack.c.h.b16 %v1109
    %v1289 = vunpack.c.l.b16 %v1110
    %v1290 = vunpack.c.h.b16 %v1110
    %v1291 = vunpack.c.l.b16 %v1111
    %v1292 = vunpack.c.h.b16 %v1111
    %v1293 = vunpack.c.l.b16 %v1112
    %v1294 = vunpack.c.h.b16 %v1112
    %v1295 = vunpack.c.l.b16 %v1113
    %v1296 = vunpack.c.h.b16 %v1113
    %v1297 = vunpack.c.l.b16 %v1114
    %v1298 = vunpack.c.h.b16 %v1114
    %v1299 = vunpack.c.l.b16 %v1115
    %v1300 = vunpack.c.h.b16 %v1115
    %v1301 = vunpack.c.l.b16 %v1116
    %v1302 = vunpack.c.h.b16 %v1116
    %v1303 = vunpack.c.l.b16 %v1117
    %v1304 = vunpack.c.h.b16 %v1117
    %v1305 = vunpack.c.l.b16 %v1118
    %v1306 = vunpack.c.h.b16 %v1118
    %v1307 = vunpack.c.l.b16 %v1119
    %v1308 = vunpack.c.h.b16 %v1119
    %v1309 = vunpack.c.l.b16 %v1120
    %v1310 = vunpack.c.h.b16 %v1120
    %v1311 = vunpack.c.l.b16 %v1121
    %v1312 = vunpack.c.h.b16 %v1121
    %v1313 = vunpack.c.l.b16 %v1122
    %v1314 = vunpack.c.h.b16 %v1122
    %v1315 = vunpack.c.l.b16 %v1123
    %v1316 = vunpack.c.h.b16 %v1123
    %v1317 = vunpack.c.l.b16 %v1124
    %v1318 = vunpack.c.h.b16 %v1124
    %v1319 = vunpack.c.l.b16 %v1125
    %v1320 = vunpack.c.h.b16 %v1125
    %v1321 = vunpack.c.l.b16 %v1126
    %v1322 = vunpack.c.h.b16 %v1126
    %v1323 = vunpack.c.l.b16 %v1127
    %v1324 = vunpack.c.h.b16 %v1127
    %v1325 = vunpack.c.l.b16 %v1128
    %v1326 = vunpack.c.h.b16 %v1128
    %v1327 = vunpack.c.l.b16 %v1129
    %v1328 = vunpack.c.h.b16 %v1129
    %v1329 = vunpack.c.l.b16 %v1130
    %v1330 = vunpack.c.h.b16 %v1130
    %v1331 = vunpack.c.l.b16 %v1131
    %v1332 = vunpack.c.h.b16 %v1131
    %v1333 = vunpack.c.l.b16 %v1132
    %v1334 = vunpack.c.h.b16 %v1132
    %v1335 = vunpack.c.l.b16 %v1133
    %v1336 = vunpack.c.h.b16 %v1133
    %v1337 = vunpack.c.l.b16 %v1134
    %v1338 = vunpack.c.h.b16 %v1134
    %v1339 = vunpack.c.l.b16 %v1135
    %v1340 = vunpack.c.h.b16 %v1135
    %v1341 = vunpack.c.l.b16 %v1136
    %v1342 = vunpack.c.h.b16 %v1136
    %v1343 = vunpack.c.l.b16 %v1137
    %v1344 = vunpack.c.h.b16 %v1137
    %v1345 = vunpack.c.l.b16 %v1138
    %v1346 = vunpack.c.h.b16 %v1138
    %v1347 = vunpack.c.l.b16 %v1139
    %v1348 = vunpack.c.h.b16 %v1139
    %v1349 = vunpack.c.l.b16 %v1140
    %v1350 = vunpack.c.h.b16 %v1140
    %v1351 = vunpack.c.l.b16 %v1141
    %v1352 = vunpack.c.h.b16 %v1141
    %v1353 = vunpack.c.l.b16 %v1142
    %v1354 = vunpack.c.h.b16 %v1142
    %v1355 = vunpack.c.l.b16 %v1143
    %v1356 = vunpack.c.h.b16 %v1143
    %v1357 = vunpack.c.l.b16 %v1144
    %v1358 = vunpack.c.h.b16 %v1144
    %v1359 = vunpack.c.l.b16 %v1145
    %v1360 = vunpack.c.h.b16 %v1145
    %v1361 = vunpack.c.l.b16 %v1146
    %v1362 = vunpack.c.h.b16 %v1146
    %v1363 = vunpack.c.l.b16 %v1147
    %v1364 = vunpack.c.h.b16 %v1147
    %v1365 = vunpack.c.l.b16 %v1148
    %v1366 = vunpack.c.h.b16 %v1148
    %v1367 = vunpack.c.l.b16 %v1149
    %v1368 = vunpack.c.h.b16 %v1149
    %v1369 = vunpack.c.l.b16 %v1150
    %v1370 = vunpack.c.h.b16 %v1150
    %v1371 = vunpack.c.l.b16 %v1151
    %v1372 = vunpack.c.h.b16 %v1151
    %v1373 = vpack.c.b16 %v1249, %v1245
    %v1374 = vpack.c.b16 %v1250, %v1246
    %v1375 = vpack.c.b16 %v1251, %v1247
    %v1376 = vpack.c.b16 %v1252, %v1248
    %v1377 = vpack.c.b16 %v1257, %v1253
    %v1378 = vpack.c.b16 %v1258, %v1254
    %v1379 = vpack.c.b16 %v1259, %v1255
    %v1380 = vpack.c.b16 %v1260, %v1256
    %v1381 = vpack.c.b16 %v1265, %v1261
    %v1382 = vpack.c.b16 %v1266, %v1262
    %v1383 = vpack.c.b16 %v1267, %v1263
    %v1384 = vpack.c.b16 %v1268, %v1264
    %v1385 = vpack.c.b16 %v1273, %v1269
    %v1386 = vpack.c.b16 %v1274, %v1270
    %v1387 = vpack.c.b16 %v1275, %v1271
    %v1388 = vpack.c.b16 %v1276, %v1272
    %v1389 = vpack.c.b16 %v1281, %v1277
    %v1390 = vpack.c.b16 %v1282, %v1278
    %v1391 = vpack.c.b16 %v1283, %v1279
    %v1392 = vpack.c.b16 %v1284, %v1280
    %v1393 = vpack.c.b16 %v1289, %v1285
    %v1394 = vpack.c.b16 %v1290, %v1286
    %v1395 = vpack.c.b16 %v1291, %v1287
    %v1396 = vpack.c.b16 %v1292, %v1288
    %v1397 = vpack.c.b16 %v1297, %v1293
    %v1398 = vpack.c.b16 %v1298, %v1294
    %v1399 = vpack.c.b16 %v1299, %v1295
    %v1400 = vpack.c.b16 %v1300, %v1296
    %v1401 = vpack.c.b16 %v1305, %v1301
    %v1402 = vpack.c.b16 %v1306, %v1302
    %v1403 = vpack.c.b16 %v1307, %v1303
    %v1404 = vpack.c.b16 %v1308, %v1304
    %v1405 = vpack.c.b16 %v1313, %v1309
    %v1406 = vpack.c.b16 %v1314, %v1310
    %v1407 = vpack.c.b16 %v1315, %v1311
    %v1408 = vpack.c.b16 %v1316, %v1312
    %v1409 = vpack.c.b16 %v1321, %v1317
    %v1410 = vpack.c.b16 %v1322, %v1318
    %v1411 = vpack.c.b16 %v1323, %v1319
    %v1412 = vpack.c.b16 %v1324, %v1320
    %v1413 = vpack.c.b16 %v1329, %v1325
    %v1414 = vpack.c.b16 %v1330, %v1326
    %v1415 = vpack.c.b16 %v1331, %v1327
    %v1416 = vpack.c.b16 %v1332, %v1328
    %v1417 = vpack.c.b16 %v1337, %v1333
    %v1418 = vpack.c.b16 %v1338, %v1334
    %v1419 = vpack.c.b16 %v1339, %v1335
    %v1420 = vpack.c.b16 %v1340, %v1336
    %v1421 = vpack.c.b16 %v1345, %v1341
    %v1422 = vpack.c.b16 %v1346, %v1342
    %v1423 = vpack.c.b16 %v1347, %v1343
    %v1424 = vpack.c.b16 %v1348, %v1344
    %v1425 = vpack.c.b16 %v1353, %v1349
    %v1426 = vpack.c.b16 %v1354, %v1350
    %v1427 = vpack.c.b16 %v1355, %v1351
    %v1428 = vpack.c.b16 %v1356, %v1352
    %v1429 = vpack.c.b16 %v1361, %v1357
    %v1430 = vpack.c.b16 %v1362, %v1358
    %v1431 = vpack.c.b16 %v1363, %v1359
    %v1432 = vpack.c.b16 %v1364, %v1360
    %v1433 = vpack.c.b16 %v1369, %v1365
    %v1434 = vpack.c.b16 %v1370, %v1366
    %v1435 = vpack.c.b16 %v1371, %v1367
    %v1436 = vpack.c.b16 %v1372, %v1368
    %1501 = vmatprep.subr.bf16.mxu0 %v1374
    %1502 = vmatpush1.bf16.msra.mxu0 %v1373
    %1503 = vmatprep.subr.bf16.mxu0 %v1378
    %1504 = vmatpush1.bf16.msra.mxu0 %v1377
    %1505 = vmatprep.subr.bf16.mxu0 %v1382
    %1506 = vmatpush1.bf16.msra.mxu0 %v1381
    %1507 = vmatprep.subr.bf16.mxu0 %v1386
    %1508 = vmatpush1.bf16.msra.mxu0 %v1385
    %1509 = vmatprep.subr.bf16.mxu0 %v1390
    %1510 = vmatpush1.bf16.msra.mxu0 %v1389
    %1511 = vmatprep.subr.bf16.mxu0 %v1394
    %1512 = vmatpush1.bf16.msra.mxu0 %v1393
    %1513 = vmatprep.subr.bf16.mxu0 %v1398
    %1514 = vmatpush1.bf16.msra.mxu0 %v1397
    %1515 = vmatprep.subr.bf16.mxu0 %v1402
    %1516 = vmatpush1.bf16.msra.mxu0 %v1401
    %1517 = vmatprep.subr.bf16.mxu0 %v1406
    %1518 = vmatpush1.bf16.msra.mxu0 %v1405
    %1519 = vmatprep.subr.bf16.mxu0 %v1410
    %1520 = vmatpush1.bf16.msra.mxu0 %v1409
    %1521 = vmatprep.subr.bf16.mxu0 %v1414
    %1522 = vmatpush1.bf16.msra.mxu0 %v1413
    %1523 = vmatprep.subr.bf16.mxu0 %v1418
    %1524 = vmatpush1.bf16.msra.mxu0 %v1417
    %1525 = vmatprep.subr.bf16.mxu0 %v1422
    %1526 = vmatpush1.bf16.msra.mxu0 %v1421
    %1527 = vmatprep.subr.bf16.mxu0 %v1426
    %1528 = vmatpush1.bf16.msra.mxu0 %v1425
    %1529 = vmatprep.subr.bf16.mxu0 %v1430
    %1530 = vmatpush1.bf16.msra.mxu0 %v1429
    %1531 = vmatprep.subr.bf16.mxu0 %v1434
    %1532 = vmatpush1.bf16.msra.mxu0 %v1433
    %1533 = vmatprep.mubr.bf16.mxu0 %v1178
    %1534 = vmatmul.mubr.bf16.gmra.mrb[0].mxu0 %v1177
    %v1535 = vpop.f32.mrb[0].mxu0
    %v1536 = vadd.f32 %v1157, %v1535
    %v1537 = vpop.f32.mrb[0].mxu0
    %v1538 = vadd.f32 %v1161, %v1537
    %v1539 = vpop.f32.mrb[0].mxu0
    %v1540 = vpop.f32.mrb[0].mxu0
    %1541 = vdwg.mxu0
    %1542 = vmatprep.subr.bf16.mxu0 %v1376
    %1543 = vmatpush1.bf16.msra.mxu0 %v1375
    %1544 = vmatprep.subr.bf16.mxu0 %v1380
    %1545 = vmatpush1.bf16.msra.mxu0 %v1379
    %1546 = vmatprep.subr.bf16.mxu0 %v1384
    %1547 = vmatpush1.bf16.msra.mxu0 %v1383
    %1548 = vmatprep.subr.bf16.mxu0 %v1388
    %1549 = vmatpush1.bf16.msra.mxu0 %v1387
    %1550 = vmatprep.subr.bf16.mxu0 %v1392
    %1551 = vmatpush1.bf16.msra.mxu0 %v1391
    %1552 = vmatprep.subr.bf16.mxu0 %v1396
    %1553 = vmatpush1.bf16.msra.mxu0 %v1395
    %1554 = vmatprep.subr.bf16.mxu0 %v1400
    %1555 = vmatpush1.bf16.msra.mxu0 %v1399
    %1556 = vmatprep.subr.bf16.mxu0 %v1404
    %1557 = vmatpush1.bf16.msra.mxu0 %v1403
    %1558 = vmatprep.subr.bf16.mxu0 %v1408
    %1559 = vmatpush1.bf16.msra.mxu0 %v1407
    %1560 = vmatprep.subr.bf16.mxu0 %v1412
    %1561 = vmatpush1.bf16.msra.mxu0 %v1411
    %1562 = vmatprep.subr.bf16.mxu0 %v1416
    %1563 = vmatpush1.bf16.msra.mxu0 %v1415
    %1564 = vmatprep.subr.bf16.mxu0 %v1420
    %1565 = vmatpush1.bf16.msra.mxu0 %v1419
    %1566 = vmatprep.subr.bf16.mxu0 %v1424
    %1567 = vmatpush1.bf16.msra.mxu0 %v1423
    %1568 = vmatprep.subr.bf16.mxu0 %v1428
    %1569 = vmatpush1.bf16.msra.mxu0 %v1427
    %1570 = vmatprep.subr.bf16.mxu0 %v1432
    %1571 = vmatpush1.bf16.msra.mxu0 %v1431
    %1572 = vmatprep.subr.bf16.mxu0 %v1436
    %1573 = vmatpush1.bf16.msra.mxu0 %v1435
    %1574 = vmatprep.mubr.bf16.mxu0 %v1178
    %1575 = vmatmul.mubr.bf16.gmra.mrb[0].mxu0 %v1177
    %v1576 = vpop.f32.mrb[0].mxu0
    %v1577 = vadd.f32 %v1165, %v1576
    %v1578 = vpop.f32.mrb[0].mxu0
    %v1579 = vadd.f32 %v1169, %v1578
    %v1580 = vpop.f32.mrb[0].mxu0
    %v1581 = vpop.f32.mrb[0].mxu0
    %1582 = vdwg.mxu0
    %v1583 = vpack.c.bf16 %v1536, %v1536
    %v1584 = vpack.c.bf16 %v1538, %v1538
    %v1585 = vpack.c.bf16 %v1577, %v1577
    %v1586 = vpack.c.bf16 %v1579, %v1579
    %vm1587 = vcmask 523264
    %v1589 = vsel %vm1587, %v544, 0
    %v1592 = vsel %vm1587, %v1040, 0
    %1594 = vmatprep.subr.mxu0 0.0
    %1595 = vmatpush1.xpose.msra.mxu0 %v1592
    %1596 = vmatprep.subr.mxu0 0.0
    %1597 = vmatpush1.xpose.msra.mxu0 0.0
    %1598 = vmatprep.subr.mxu0 0.0
    %1599 = vmatpush1.xpose.msra.mxu0 0.0
    %1600 = vmatprep.subr.mxu0 0.0
    %1601 = vmatpush1.xpose.msra.mxu0 0.0
    %1602 = vmatprep.subr.mxu0 0.0
    %1603 = vmatpush1.xpose.msra.mxu0 0.0
    %1604 = vmatprep.subr.mxu0 0.0
    %1605 = vmatpush1.xpose.msra.mxu0 0.0
    %1606 = vmatprep.subr.mxu0 0.0
    %1607 = vmatpush1.xpose.msra.mxu0 0.0
    %1608 = vmatprep.subr.mxu0 0.0
    %1609 = vmatpush1.xpose.msra.mxu0 0.0
    %1610 = vmatprep.subr.mxu0 0.0
    %1611 = vmatpush1.xpose.msra.mxu0 0.0
    %1612 = vmatprep.subr.mxu0 0.0
    %1613 = vmatpush1.xpose.msra.mxu0 0.0
    %1614 = vmatprep.subr.mxu0 0.0
    %1615 = vmatpush1.xpose.msra.mxu0 0.0
    %1616 = vmatprep.subr.mxu0 0.0
    %1617 = vmatpush1.xpose.msra.mxu0 0.0
    %1618 = vmatprep.subr.mxu0 0.0
    %1619 = vmatpush1.xpose.msra.mxu0 0.0
    %1620 = vmatprep.subr.mxu0 0.0
    %1621 = vmatpush1.xpose.msra.mxu0 0.0
    %1622 = vmatprep.subr.mxu0 0.0
    %1623 = vmatpush1.xpose.msra.mxu0 0.0
    %1624 = vmatprep.subr.mxu0 0.0
    %1625 = vmatpush1.xpose.msra.mxu0 0.0
    %1626 = vmatprep.subr.mxu0 0.0
    %1627 = vmatpush1.xpose.msra.mxu0 0.0
    %1628 = vmatprep.subr.mxu0 0.0
    %1629 = vmatpush1.xpose.msra.mxu0 0.0
    %1630 = vmatprep.subr.mxu0 0.0
    %1631 = vmatpush1.xpose.msra.mxu0 0.0
    %1632 = vmatprep.subr.mxu0 0.0
    %1633 = vmatpush1.xpose.msra.mxu0 0.0
    %1634 = vmatprep.subr.mxu0 0.0
    %1635 = vmatpush1.xpose.msra.mxu0 0.0
    %1636 = vmatprep.subr.mxu0 0.0
    %1637 = vmatpush1.xpose.msra.mxu0 0.0
    %1638 = vmatprep.subr.mxu0 0.0
    %1639 = vmatpush1.xpose.msra.mxu0 0.0
    %1640 = vmatprep.subr.mxu0 0.0
    %1641 = vmatpush1.xpose.msra.mxu0 0.0
    %1642 = vmatprep.subr.mxu0 0.0
    %1643 = vmatpush1.xpose.msra.mxu0 0.0
    %1644 = vmatprep.subr.mxu0 0.0
    %1645 = vmatpush1.xpose.msra.mxu0 0.0
    %1646 = vmatprep.subr.mxu0 0.0
    %1647 = vmatpush1.xpose.msra.mxu0 0.0
    %1648 = vmatprep.subr.mxu0 0.0
    %1649 = vmatpush1.xpose.msra.mxu0 0.0
    %1650 = vmatprep.subr.mxu0 0.0
    %1651 = vmatpush1.xpose.msra.mxu0 0.0
    %1652 = vmatprep.subr.mxu0 0.0
    %1653 = vmatpush1.xpose.msra.mxu0 0.0
    %1654 = vmatprep.subr.mxu0 0.0
    %1655 = vmatpush1.xpose.msra.mxu0 0.0
    %1656 = vmatprep.subr.mxu0 0.0
    %1657 = vmatpush1.xpose.msra.mxu0 0.0
    %1658 = vmatprep.mubr.f32.mxu0 0.0
    %1659 = vmatmul.mubr.f32.gmra.mrb[0].mxu0 %v1589
    %v1660 = vpop.f32.mrb[0].mxu0
    %v1661 = vadd.f32 0.0, %v1660
    %v1662 = vpop.f32.mrb[0].mxu0
    %1663 = vdwg.mxu0
    %1664 = vrot.lane.b32.xlu0 %v544, 64
    %v1665 = vpop.permute.xlu0 %1664
    %1666 = vrot.lane.b32.xlu0 %v1040, 64
    %v1667 = vpop.permute.xlu0 %1666
    %v1668 = vsel %vm1587, %v1665, 0
    %v1670 = vsel %vm1587, %v1667, 0
    %1672 = vmatprep.subr.mxu0 0.0
    %1673 = vmatpush1.xpose.msra.mxu0 %v1670
    %1674 = vmatprep.subr.mxu0 0.0
    %1675 = vmatpush1.xpose.msra.mxu0 0.0
    %1676 = vmatprep.subr.mxu0 0.0
    %1677 = vmatpush1.xpose.msra.mxu0 0.0
    %1678 = vmatprep.subr.mxu0 0.0
    %1679 = vmatpush1.xpose.msra.mxu0 0.0
    %1680 = vmatprep.subr.mxu0 0.0
    %1681 = vmatpush1.xpose.msra.mxu0 0.0
    %1682 = vmatprep.subr.mxu0 0.0
    %1683 = vmatpush1.xpose.msra.mxu0 0.0
    %1684 = vmatprep.subr.mxu0 0.0
    %1685 = vmatpush1.xpose.msra.mxu0 0.0
    %1686 = vmatprep.subr.mxu0 0.0
    %1687 = vmatpush1.xpose.msra.mxu0 0.0
    %1688 = vmatprep.subr.mxu0 0.0
    %1689 = vmatpush1.xpose.msra.mxu0 0.0
    %1690 = vmatprep.subr.mxu0 0.0
    %1691 = vmatpush1.xpose.msra.mxu0 0.0
    %1692 = vmatprep.subr.mxu0 0.0
    %1693 = vmatpush1.xpose.msra.mxu0 0.0
    %1694 = vmatprep.subr.mxu0 0.0
    %1695 = vmatpush1.xpose.msra.mxu0 0.0
    %1696 = vmatprep.subr.mxu0 0.0
    %1697 = vmatpush1.xpose.msra.mxu0 0.0
    %1698 = vmatprep.subr.mxu0 0.0
    %1699 = vmatpush1.xpose.msra.mxu0 0.0
    %1700 = vmatprep.subr.mxu0 0.0
    %1701 = vmatpush1.xpose.msra.mxu0 0.0
    %1702 = vmatprep.subr.mxu0 0.0
    %1703 = vmatpush1.xpose.msra.mxu0 0.0
    %1704 = vmatprep.subr.mxu0 0.0
    %1705 = vmatpush1.xpose.msra.mxu0 0.0
    %1706 = vmatprep.subr.mxu0 0.0
    %1707 = vmatpush1.xpose.msra.mxu0 0.0
    %1708 = vmatprep.subr.mxu0 0.0
    %1709 = vmatpush1.xpose.msra.mxu0 0.0
    %1710 = vmatprep.subr.mxu0 0.0
    %1711 = vmatpush1.xpose.msra.mxu0 0.0
    %1712 = vmatprep.subr.mxu0 0.0
    %1713 = vmatpush1.xpose.msra.mxu0 0.0
    %1714 = vmatprep.subr.mxu0 0.0
    %1715 = vmatpush1.xpose.msra.mxu0 0.0
    %1716 = vmatprep.subr.mxu0 0.0
    %1717 = vmatpush1.xpose.msra.mxu0 0.0
    %1718 = vmatprep.subr.mxu0 0.0
    %1719 = vmatpush1.xpose.msra.mxu0 0.0
    %1720 = vmatprep.subr.mxu0 0.0
    %1721 = vmatpush1.xpose.msra.mxu0 0.0
    %1722 = vmatprep.subr.mxu0 0.0
    %1723 = vmatpush1.xpose.msra.mxu0 0.0
    %1724 = vmatprep.subr.mxu0 0.0
    %1725 = vmatpush1.xpose.msra.mxu0 0.0
    %1726 = vmatprep.subr.mxu0 0.0
    %1727 = vmatpush1.xpose.msra.mxu0 0.0
    %1728 = vmatprep.subr.mxu0 0.0
    %1729 = vmatpush1.xpose.msra.mxu0 0.0
    %1730 = vmatprep.subr.mxu0 0.0
    %1731 = vmatpush1.xpose.msra.mxu0 0.0
    %1732 = vmatprep.subr.mxu0 0.0
    %1733 = vmatpush1.xpose.msra.mxu0 0.0
    %1734 = vmatprep.subr.mxu0 0.0
    %1735 = vmatpush1.xpose.msra.mxu0 0.0
    %1736 = vmatprep.mubr.f32.mxu0 0.0
    %1737 = vmatmul.mubr.f32.gmra.mrb[0].mxu0 %v1668
    %v1738 = vpop.f32.mrb[0].mxu0
    %v1739 = vadd.f32 0.0, %v1738
    %v1740 = vpop.f32.mrb[0].mxu0
    %1741 = vdwg.mxu0
    %v1743 = vsel %vm1587, %v546, 0
    %v1746 = vsel %vm1587, %v1042, 0
    %1748 = vmatprep.subr.mxu0 0.0
    %1749 = vmatpush1.xpose.msra.mxu0 %v1746
    %1750 = vmatprep.subr.mxu0 0.0
    %1751 = vmatpush1.xpose.msra.mxu0 0.0
    %1752 = vmatprep.subr.mxu0 0.0
    %1753 = vmatpush1.xpose.msra.mxu0 0.0
    %1754 = vmatprep.subr.mxu0 0.0
    %1755 = vmatpush1.xpose.msra.mxu0 0.0
    %1756 = vmatprep.subr.mxu0 0.0
    %1757 = vmatpush1.xpose.msra.mxu0 0.0
    %1758 = vmatprep.subr.mxu0 0.0
    %1759 = vmatpush1.xpose.msra.mxu0 0.0
    %1760 = vmatprep.subr.mxu0 0.0
    %1761 = vmatpush1.xpose.msra.mxu0 0.0
    %1762 = vmatprep.subr.mxu0 0.0
    %1763 = vmatpush1.xpose.msra.mxu0 0.0
    %1764 = vmatprep.subr.mxu0 0.0
    %1765 = vmatpush1.xpose.msra.mxu0 0.0
    %1766 = vmatprep.subr.mxu0 0.0
    %1767 = vmatpush1.xpose.msra.mxu0 0.0
    %1768 = vmatprep.subr.mxu0 0.0
    %1769 = vmatpush1.xpose.msra.mxu0 0.0
    %1770 = vmatprep.subr.mxu0 0.0
    %1771 = vmatpush1.xpose.msra.mxu0 0.0
    %1772 = vmatprep.subr.mxu0 0.0
    %1773 = vmatpush1.xpose.msra.mxu0 0.0
    %1774 = vmatprep.subr.mxu0 0.0
    %1775 = vmatpush1.xpose.msra.mxu0 0.0
    %1776 = vmatprep.subr.mxu0 0.0
    %1777 = vmatpush1.xpose.msra.mxu0 0.0
    %1778 = vmatprep.subr.mxu0 0.0
    %1779 = vmatpush1.xpose.msra.mxu0 0.0
    %1780 = vmatprep.subr.mxu0 0.0
    %1781 = vmatpush1.xpose.msra.mxu0 0.0
    %1782 = vmatprep.subr.mxu0 0.0
    %1783 = vmatpush1.xpose.msra.mxu0 0.0
    %1784 = vmatprep.subr.mxu0 0.0
    %1785 = vmatpush1.xpose.msra.mxu0 0.0
    %1786 = vmatprep.subr.mxu0 0.0
    %1787 = vmatpush1.xpose.msra.mxu0 0.0
    %1788 = vmatprep.subr.mxu0 0.0
    %1789 = vmatpush1.xpose.msra.mxu0 0.0
    %1790 = vmatprep.subr.mxu0 0.0
    %1791 = vmatpush1.xpose.msra.mxu0 0.0
    %1792 = vmatprep.subr.mxu0 0.0
    %1793 = vmatpush1.xpose.msra.mxu0 0.0
    %1794 = vmatprep.subr.mxu0 0.0
    %1795 = vmatpush1.xpose.msra.mxu0 0.0
    %1796 = vmatprep.subr.mxu0 0.0
    %1797 = vmatpush1.xpose.msra.mxu0 0.0
    %1798 = vmatprep.subr.mxu0 0.0
    %1799 = vmatpush1.xpose.msra.mxu0 0.0
    %1800 = vmatprep.subr.mxu0 0.0
    %1801 = vmatpush1.xpose.msra.mxu0 0.0
    %1802 = vmatprep.subr.mxu0 0.0
    %1803 = vmatpush1.xpose.msra.mxu0 0.0
    %1804 = vmatprep.subr.mxu0 0.0
    %1805 = vmatpush1.xpose.msra.mxu0 0.0
    %1806 = vmatprep.subr.mxu0 0.0
    %1807 = vmatpush1.xpose.msra.mxu0 0.0
    %1808 = vmatprep.subr.mxu0 0.0
    %1809 = vmatpush1.xpose.msra.mxu0 0.0
    %1810 = vmatprep.subr.mxu0 0.0
    %1811 = vmatpush1.xpose.msra.mxu0 0.0
    %1812 = vmatprep.mubr.f32.mxu0 0.0
    %1813 = vmatmul.mubr.f32.gmra.mrb[0].mxu0 %v1743
    %v1814 = vpop.f32.mrb[0].mxu0
    %v1815 = vadd.f32 0.0, %v1814
    %v1816 = vpop.f32.mrb[0].mxu0
    %1817 = vdwg.mxu0
    %1818 = vrot.lane.b32.xlu0 %v546, 64
    %v1819 = vpop.permute.xlu0 %1818
    %1820 = vrot.lane.b32.xlu0 %v1042, 64
    %v1821 = vpop.permute.xlu0 %1820
    %v1822 = vsel %vm1587, %v1819, 0
    %v1824 = vsel %vm1587, %v1821, 0
    %1826 = vmatprep.subr.mxu0 0.0
    %1827 = vmatpush1.xpose.msra.mxu0 %v1824
    %1828 = vmatprep.subr.mxu0 0.0
    %1829 = vmatpush1.xpose.msra.mxu0 0.0
    %1830 = vmatprep.subr.mxu0 0.0
    %1831 = vmatpush1.xpose.msra.mxu0 0.0
    %1832 = vmatprep.subr.mxu0 0.0
    %1833 = vmatpush1.xpose.msra.mxu0 0.0
    %1834 = vmatprep.subr.mxu0 0.0
    %1835 = vmatpush1.xpose.msra.mxu0 0.0
    %1836 = vmatprep.subr.mxu0 0.0
    %1837 = vmatpush1.xpose.msra.mxu0 0.0
    %1838 = vmatprep.subr.mxu0 0.0
    %1839 = vmatpush1.xpose.msra.mxu0 0.0
    %1840 = vmatprep.subr.mxu0 0.0
    %1841 = vmatpush1.xpose.msra.mxu0 0.0
    %1842 = vmatprep.subr.mxu0 0.0
    %1843 = vmatpush1.xpose.msra.mxu0 0.0
    %1844 = vmatprep.subr.mxu0 0.0
    %1845 = vmatpush1.xpose.msra.mxu0 0.0
    %1846 = vmatprep.subr.mxu0 0.0
    %1847 = vmatpush1.xpose.msra.mxu0 0.0
    %1848 = vmatprep.subr.mxu0 0.0
    %1849 = vmatpush1.xpose.msra.mxu0 0.0
    %1850 = vmatprep.subr.mxu0 0.0
    %1851 = vmatpush1.xpose.msra.mxu0 0.0
    %1852 = vmatprep.subr.mxu0 0.0
    %1853 = vmatpush1.xpose.msra.mxu0 0.0
    %1854 = vmatprep.subr.mxu0 0.0
    %1855 = vmatpush1.xpose.msra.mxu0 0.0
    %1856 = vmatprep.subr.mxu0 0.0
    %1857 = vmatpush1.xpose.msra.mxu0 0.0
    %1858 = vmatprep.subr.mxu0 0.0
    %1859 = vmatpush1.xpose.msra.mxu0 0.0
    %1860 = vmatprep.subr.mxu0 0.0
    %1861 = vmatpush1.xpose.msra.mxu0 0.0
    %1862 = vmatprep.subr.mxu0 0.0
    %1863 = vmatpush1.xpose.msra.mxu0 0.0
    %1864 = vmatprep.subr.mxu0 0.0
    %1865 = vmatpush1.xpose.msra.mxu0 0.0
    %1866 = vmatprep.subr.mxu0 0.0
    %1867 = vmatpush1.xpose.msra.mxu0 0.0
    %1868 = vmatprep.subr.mxu0 0.0
    %1869 = vmatpush1.xpose.msra.mxu0 0.0
    %1870 = vmatprep.subr.mxu0 0.0
    %1871 = vmatpush1.xpose.msra.mxu0 0.0
    %1872 = vmatprep.subr.mxu0 0.0
    %1873 = vmatpush1.xpose.msra.mxu0 0.0
    %1874 = vmatprep.subr.mxu0 0.0
    %1875 = vmatpush1.xpose.msra.mxu0 0.0
    %1876 = vmatprep.subr.mxu0 0.0
    %1877 = vmatpush1.xpose.msra.mxu0 0.0
    %1878 = vmatprep.subr.mxu0 0.0
    %1879 = vmatpush1.xpose.msra.mxu0 0.0
    %1880 = vmatprep.subr.mxu0 0.0
    %1881 = vmatpush1.xpose.msra.mxu0 0.0
    %1882 = vmatprep.subr.mxu0 0.0
    %1883 = vmatpush1.xpose.msra.mxu0 0.0
    %1884 = vmatprep.subr.mxu0 0.0
    %1885 = vmatpush1.xpose.msra.mxu0 0.0
    %1886 = vmatprep.subr.mxu0 0.0
    %1887 = vmatpush1.xpose.msra.mxu0 0.0
    %1888 = vmatprep.subr.mxu0 0.0
    %1889 = vmatpush1.xpose.msra.mxu0 0.0
    %1890 = vmatprep.mubr.f32.mxu0 0.0
    %1891 = vmatmul.mubr.f32.gmra.mrb[0].mxu0 %v1822
    %v1892 = vpop.f32.mrb[0].mxu0
    %v1893 = vadd.f32 0.0, %v1892
    %v1894 = vpop.f32.mrb[0].mxu0
    %1895 = vdwg.mxu0
    %v1897 = vsel %vm1587, %v585, 0
    %v1900 = vsel %vm1587, %v1081, 0
    %1902 = vmatprep.subr.mxu0 0.0
    %1903 = vmatpush1.xpose.msra.mxu0 %v1900
    %1904 = vmatprep.subr.mxu0 0.0
    %1905 = vmatpush1.xpose.msra.mxu0 0.0
    %1906 = vmatprep.subr.mxu0 0.0
    %1907 = vmatpush1.xpose.msra.mxu0 0.0
    %1908 = vmatprep.subr.mxu0 0.0
    %1909 = vmatpush1.xpose.msra.mxu0 0.0
    %1910 = vmatprep.subr.mxu0 0.0
    %1911 = vmatpush1.xpose.msra.mxu0 0.0
    %1912 = vmatprep.subr.mxu0 0.0
    %1913 = vmatpush1.xpose.msra.mxu0 0.0
    %1914 = vmatprep.subr.mxu0 0.0
    %1915 = vmatpush1.xpose.msra.mxu0 0.0
    %1916 = vmatprep.subr.mxu0 0.0
    %1917 = vmatpush1.xpose.msra.mxu0 0.0
    %1918 = vmatprep.subr.mxu0 0.0
    %1919 = vmatpush1.xpose.msra.mxu0 0.0
    %1920 = vmatprep.subr.mxu0 0.0
    %1921 = vmatpush1.xpose.msra.mxu0 0.0
    %1922 = vmatprep.subr.mxu0 0.0
    %1923 = vmatpush1.xpose.msra.mxu0 0.0
    %1924 = vmatprep.subr.mxu0 0.0
    %1925 = vmatpush1.xpose.msra.mxu0 0.0
    %1926 = vmatprep.subr.mxu0 0.0
    %1927 = vmatpush1.xpose.msra.mxu0 0.0
    %1928 = vmatprep.subr.mxu0 0.0
    %1929 = vmatpush1.xpose.msra.mxu0 0.0
    %1930 = vmatprep.subr.mxu0 0.0
    %1931 = vmatpush1.xpose.msra.mxu0 0.0
    %1932 = vmatprep.subr.mxu0 0.0
    %1933 = vmatpush1.xpose.msra.mxu0 0.0
    %1934 = vmatprep.subr.mxu0 0.0
    %1935 = vmatpush1.xpose.msra.mxu0 0.0
    %1936 = vmatprep.subr.mxu0 0.0
    %1937 = vmatpush1.xpose.msra.mxu0 0.0
    %1938 = vmatprep.subr.mxu0 0.0
    %1939 = vmatpush1.xpose.msra.mxu0 0.0
    %1940 = vmatprep.subr.mxu0 0.0
    %1941 = vmatpush1.xpose.msra.mxu0 0.0
    %1942 = vmatprep.subr.mxu0 0.0
    %1943 = vmatpush1.xpose.msra.mxu0 0.0
    %1944 = vmatprep.subr.mxu0 0.0
    %1945 = vmatpush1.xpose.msra.mxu0 0.0
    %1946 = vmatprep.subr.mxu0 0.0
    %1947 = vmatpush1.xpose.msra.mxu0 0.0
    %1948 = vmatprep.subr.mxu0 0.0
    %1949 = vmatpush1.xpose.msra.mxu0 0.0
    %1950 = vmatprep.subr.mxu0 0.0
    %1951 = vmatpush1.xpose.msra.mxu0 0.0
    %1952 = vmatprep.subr.mxu0 0.0
    %1953 = vmatpush1.xpose.msra.mxu0 0.0
    %1954 = vmatprep.subr.mxu0 0.0
    %1955 = vmatpush1.xpose.msra.mxu0 0.0
    %1956 = vmatprep.subr.mxu0 0.0
    %1957 = vmatpush1.xpose.msra.mxu0 0.0
    %1958 = vmatprep.subr.mxu0 0.0
    %1959 = vmatpush1.xpose.msra.mxu0 0.0
    %1960 = vmatprep.subr.mxu0 0.0
    %1961 = vmatpush1.xpose.msra.mxu0 0.0
    %1962 = vmatprep.subr.mxu0 0.0
    %1963 = vmatpush1.xpose.msra.mxu0 0.0
    %1964 = vmatprep.subr.mxu0 0.0
    %1965 = vmatpush1.xpose.msra.mxu0 0.0
    %1966 = vmatprep.mubr.f32.mxu0 0.0
    %1967 = vmatmul.mubr.f32.gmra.mrb[0].mxu0 %v1897
    %v1968 = vpop.f32.mrb[0].mxu0
    %v1969 = vadd.f32 0.0, %v1968
    %v1970 = vpop.f32.mrb[0].mxu0
    %1971 = vdwg.mxu0
    %1972 = vrot.lane.b32.xlu0 %v585, 64
    %v1973 = vpop.permute.xlu0 %1972
    %1974 = vrot.lane.b32.xlu0 %v1081, 64
    %v1975 = vpop.permute.xlu0 %1974
    %v1976 = vsel %vm1587, %v1973, 0
    %v1978 = vsel %vm1587, %v1975, 0
    %1980 = vmatprep.subr.mxu0 0.0
    %1981 = vmatpush1.xpose.msra.mxu0 %v1978
    %1982 = vmatprep.subr.mxu0 0.0
    %1983 = vmatpush1.xpose.msra.mxu0 0.0
    %1984 = vmatprep.subr.mxu0 0.0
    %1985 = vmatpush1.xpose.msra.mxu0 0.0
    %1986 = vmatprep.subr.mxu0 0.0
    %1987 = vmatpush1.xpose.msra.mxu0 0.0
    %1988 = vmatprep.subr.mxu0 0.0
    %1989 = vmatpush1.xpose.msra.mxu0 0.0
    %1990 = vmatprep.subr.mxu0 0.0
    %1991 = vmatpush1.xpose.msra.mxu0 0.0
    %1992 = vmatprep.subr.mxu0 0.0
    %1993 = vmatpush1.xpose.msra.mxu0 0.0
    %1994 = vmatprep.subr.mxu0 0.0
    %1995 = vmatpush1.xpose.msra.mxu0 0.0
    %1996 = vmatprep.subr.mxu0 0.0
    %1997 = vmatpush1.xpose.msra.mxu0 0.0
    %1998 = vmatprep.subr.mxu0 0.0
    %1999 = vmatpush1.xpose.msra.mxu0 0.0
    %2000 = vmatprep.subr.mxu0 0.0
    %2001 = vmatpush1.xpose.msra.mxu0 0.0
    %2002 = vmatprep.subr.mxu0 0.0
    %2003 = vmatpush1.xpose.msra.mxu0 0.0
    %2004 = vmatprep.subr.mxu0 0.0
    %2005 = vmatpush1.xpose.msra.mxu0 0.0
    %2006 = vmatprep.subr.mxu0 0.0
    %2007 = vmatpush1.xpose.msra.mxu0 0.0
    %2008 = vmatprep.subr.mxu0 0.0
    %2009 = vmatpush1.xpose.msra.mxu0 0.0
    %2010 = vmatprep.subr.mxu0 0.0
    %2011 = vmatpush1.xpose.msra.mxu0 0.0
    %2012 = vmatprep.subr.mxu0 0.0
    %2013 = vmatpush1.xpose.msra.mxu0 0.0
    %2014 = vmatprep.subr.mxu0 0.0
    %2015 = vmatpush1.xpose.msra.mxu0 0.0
    %2016 = vmatprep.subr.mxu0 0.0
    %2017 = vmatpush1.xpose.msra.mxu0 0.0
    %2018 = vmatprep.subr.mxu0 0.0
    %2019 = vmatpush1.xpose.msra.mxu0 0.0
    %2020 = vmatprep.subr.mxu0 0.0
    %2021 = vmatpush1.xpose.msra.mxu0 0.0
    %2022 = vmatprep.subr.mxu0 0.0
    %2023 = vmatpush1.xpose.msra.mxu0 0.0
    %2024 = vmatprep.subr.mxu0 0.0
    %2025 = vmatpush1.xpose.msra.mxu0 0.0
    %2026 = vmatprep.subr.mxu0 0.0
    %2027 = vmatpush1.xpose.msra.mxu0 0.0
    %2028 = vmatprep.subr.mxu0 0.0
    %2029 = vmatpush1.xpose.msra.mxu0 0.0
    %2030 = vmatprep.subr.mxu0 0.0
    %2031 = vmatpush1.xpose.msra.mxu0 0.0
    %2032 = vmatprep.subr.mxu0 0.0
    %2033 = vmatpush1.xpose.msra.mxu0 0.0
    %2034 = vmatprep.subr.mxu0 0.0
    %2035 = vmatpush1.xpose.msra.mxu0 0.0
    %2036 = vmatprep.subr.mxu0 0.0
    %2037 = vmatpush1.xpose.msra.mxu0 0.0
    %2038 = vmatprep.subr.mxu0 0.0
    %2039 = vmatpush1.xpose.msra.mxu0 0.0
    %2040 = vmatprep.subr.mxu0 0.0
    %2041 = vmatpush1.xpose.msra.mxu0 0.0
    %2042 = vmatprep.subr.mxu0 0.0
    %2043 = vmatpush1.xpose.msra.mxu0 0.0
    %2044 = vmatprep.mubr.f32.mxu0 0.0
    %2045 = vmatmul.mubr.f32.gmra.mrb[0].mxu0 %v1976
    %v2046 = vpop.f32.mrb[0].mxu0
    %v2047 = vadd.f32 0.0, %v2046
    %v2048 = vpop.f32.mrb[0].mxu0
    %2049 = vdwg.mxu0
    %v2051 = vsel %vm1587, %v587, 0
    %v2054 = vsel %vm1587, %v1083, 0
    %2056 = vmatprep.subr.mxu0 0.0
    %2057 = vmatpush1.xpose.msra.mxu0 %v2054
    %2058 = vmatprep.subr.mxu0 0.0
    %2059 = vmatpush1.xpose.msra.mxu0 0.0
    %2060 = vmatprep.subr.mxu0 0.0
    %2061 = vmatpush1.xpose.msra.mxu0 0.0
    %2062 = vmatprep.subr.mxu0 0.0
    %2063 = vmatpush1.xpose.msra.mxu0 0.0
    %2064 = vmatprep.subr.mxu0 0.0
    %2065 = vmatpush1.xpose.msra.mxu0 0.0
    %2066 = vmatprep.subr.mxu0 0.0
    %2067 = vmatpush1.xpose.msra.mxu0 0.0
    %2068 = vmatprep.subr.mxu0 0.0
    %2069 = vmatpush1.xpose.msra.mxu0 0.0
    %2070 = vmatprep.subr.mxu0 0.0
    %2071 = vmatpush1.xpose.msra.mxu0 0.0
    %2072 = vmatprep.subr.mxu0 0.0
    %2073 = vmatpush1.xpose.msra.mxu0 0.0
    %2074 = vmatprep.subr.mxu0 0.0
    %2075 = vmatpush1.xpose.msra.mxu0 0.0
    %2076 = vmatprep.subr.mxu0 0.0
    %2077 = vmatpush1.xpose.msra.mxu0 0.0
    %2078 = vmatprep.subr.mxu0 0.0
    %2079 = vmatpush1.xpose.msra.mxu0 0.0
    %2080 = vmatprep.subr.mxu0 0.0
    %2081 = vmatpush1.xpose.msra.mxu0 0.0
    %2082 = vmatprep.subr.mxu0 0.0
    %2083 = vmatpush1.xpose.msra.mxu0 0.0
    %2084 = vmatprep.subr.mxu0 0.0
    %2085 = vmatpush1.xpose.msra.mxu0 0.0
    %2086 = vmatprep.subr.mxu0 0.0
    %2087 = vmatpush1.xpose.msra.mxu0 0.0
    %2088 = vmatprep.subr.mxu0 0.0
    %2089 = vmatpush1.xpose.msra.mxu0 0.0
    %2090 = vmatprep.subr.mxu0 0.0
    %2091 = vmatpush1.xpose.msra.mxu0 0.0
    %2092 = vmatprep.subr.mxu0 0.0
    %2093 = vmatpush1.xpose.msra.mxu0 0.0
    %2094 = vmatprep.subr.mxu0 0.0
    %2095 = vmatpush1.xpose.msra.mxu0 0.0
    %2096 = vmatprep.subr.mxu0 0.0
    %2097 = vmatpush1.xpose.msra.mxu0 0.0
    %2098 = vmatprep.subr.mxu0 0.0
    %2099 = vmatpush1.xpose.msra.mxu0 0.0
    %2100 = vmatprep.subr.mxu0 0.0
    %2101 = vmatpush1.xpose.msra.mxu0 0.0
    %2102 = vmatprep.subr.mxu0 0.0
    %2103 = vmatpush1.xpose.msra.mxu0 0.0
    %2104 = vmatprep.subr.mxu0 0.0
    %2105 = vmatpush1.xpose.msra.mxu0 0.0
    %2106 = vmatprep.subr.mxu0 0.0
    %2107 = vmatpush1.xpose.msra.mxu0 0.0
    %2108 = vmatprep.subr.mxu0 0.0
    %2109 = vmatpush1.xpose.msra.mxu0 0.0
    %2110 = vmatprep.subr.mxu0 0.0
    %2111 = vmatpush1.xpose.msra.mxu0 0.0
    %2112 = vmatprep.subr.mxu0 0.0
    %2113 = vmatpush1.xpose.msra.mxu0 0.0
    %2114 = vmatprep.subr.mxu0 0.0
    %2115 = vmatpush1.xpose.msra.mxu0 0.0
    %2116 = vmatprep.subr.mxu0 0.0
    %2117 = vmatpush1.xpose.msra.mxu0 0.0
    %2118 = vmatprep.subr.mxu0 0.0
    %2119 = vmatpush1.xpose.msra.mxu0 0.0
    %2120 = vmatprep.mubr.f32.mxu0 0.0
    %2121 = vmatmul.mubr.f32.gmra.mrb[0].mxu0 %v2051
    %v2122 = vpop.f32.mrb[0].mxu0
    %v2123 = vadd.f32 0.0, %v2122
    %v2124 = vpop.f32.mrb[0].mxu0
    %2125 = vdwg.mxu0
    %2126 = vrot.lane.b32.xlu0 %v587, 64
    %v2127 = vpop.permute.xlu0 %2126
    %2128 = vrot.lane.b32.xlu0 %v1083, 64
    %v2129 = vpop.permute.xlu0 %2128
    %v2130 = vsel %vm1587, %v2127, 0
    %v2132 = vsel %vm1587, %v2129, 0
    %2134 = vmatprep.subr.mxu0 0.0
    %2135 = vmatpush1.xpose.msra.mxu0 %v2132
    %2136 = vmatprep.subr.mxu0 0.0
    %2137 = vmatpush1.xpose.msra.mxu0 0.0
    %2138 = vmatprep.subr.mxu0 0.0
    %2139 = vmatpush1.xpose.msra.mxu0 0.0
    %2140 = vmatprep.subr.mxu0 0.0
    %2141 = vmatpush1.xpose.msra.mxu0 0.0
    %2142 = vmatprep.subr.mxu0 0.0
    %2143 = vmatpush1.xpose.msra.mxu0 0.0
    %2144 = vmatprep.subr.mxu0 0.0
    %2145 = vmatpush1.xpose.msra.mxu0 0.0
    %2146 = vmatprep.subr.mxu0 0.0
    %2147 = vmatpush1.xpose.msra.mxu0 0.0
    %2148 = vmatprep.subr.mxu0 0.0
    %2149 = vmatpush1.xpose.msra.mxu0 0.0
    %2150 = vmatprep.subr.mxu0 0.0
    %2151 = vmatpush1.xpose.msra.mxu0 0.0
    %2152 = vmatprep.subr.mxu0 0.0
    %2153 = vmatpush1.xpose.msra.mxu0 0.0
    %2154 = vmatprep.subr.mxu0 0.0
    %2155 = vmatpush1.xpose.msra.mxu0 0.0
    %2156 = vmatprep.subr.mxu0 0.0
    %2157 = vmatpush1.xpose.msra.mxu0 0.0
    %2158 = vmatprep.subr.mxu0 0.0
    %2159 = vmatpush1.xpose.msra.mxu0 0.0
    %2160 = vmatprep.subr.mxu0 0.0
    %2161 = vmatpush1.xpose.msra.mxu0 0.0
    %2162 = vmatprep.subr.mxu0 0.0
    %2163 = vmatpush1.xpose.msra.mxu0 0.0
    %2164 = vmatprep.subr.mxu0 0.0
    %2165 = vmatpush1.xpose.msra.mxu0 0.0
    %2166 = vmatprep.subr.mxu0 0.0
    %2167 = vmatpush1.xpose.msra.mxu0 0.0
    %2168 = vmatprep.subr.mxu0 0.0
    %2169 = vmatpush1.xpose.msra.mxu0 0.0
    %2170 = vmatprep.subr.mxu0 0.0
    %2171 = vmatpush1.xpose.msra.mxu0 0.0
    %2172 = vmatprep.subr.mxu0 0.0
    %2173 = vmatpush1.xpose.msra.mxu0 0.0
    %2174 = vmatprep.subr.mxu0 0.0
    %2175 = vmatpush1.xpose.msra.mxu0 0.0
    %2176 = vmatprep.subr.mxu0 0.0
    %2177 = vmatpush1.xpose.msra.mxu0 0.0
    %2178 = vmatprep.subr.mxu0 0.0
    %2179 = vmatpush1.xpose.msra.mxu0 0.0
    %2180 = vmatprep.subr.mxu0 0.0
    %2181 = vmatpush1.xpose.msra.mxu0 0.0
    %2182 = vmatprep.subr.mxu0 0.0
    %2183 = vmatpush1.xpose.msra.mxu0 0.0
    %2184 = vmatprep.subr.mxu0 0.0
    %2185 = vmatpush1.xpose.msra.mxu0 0.0
    %2186 = vmatprep.subr.mxu0 0.0
    %2187 = vmatpush1.xpose.msra.mxu0 0.0
    %2188 = vmatprep.subr.mxu0 0.0
    %2189 = vmatpush1.xpose.msra.mxu0 0.0
    %2190 = vmatprep.subr.mxu0 0.0
    %2191 = vmatpush1.xpose.msra.mxu0 0.0
    %2192 = vmatprep.subr.mxu0 0.0
    %2193 = vmatpush1.xpose.msra.mxu0 0.0
    %2194 = vmatprep.subr.mxu0 0.0
    %2195 = vmatpush1.xpose.msra.mxu0 0.0
    %2196 = vmatprep.subr.mxu0 0.0
    %2197 = vmatpush1.xpose.msra.mxu0 0.0
    %2198 = vmatprep.mubr.f32.mxu0 0.0
    %2199 = vmatmul.mubr.f32.gmra.mrb[0].mxu0 %v2130
    %v2200 = vpop.f32.mrb[0].mxu0
    %v2201 = vadd.f32 0.0, %v2200
    %v2202 = vpop.f32.mrb[0].mxu0
    %2203 = vdwg.mxu0
    %vm2204 = vcmask 64512
    %v2205 = vsel %vm2204, %v1661, -inf
    %2206 = vmax.xlane.f32.xlu0 %v2205
    %v2207 = vpop.xlane.xlu0 %2206
    %v2208 = vsel %vm2204, %v1739, -inf
    %2209 = vmax.xlane.f32.xlu0 %v2208
    %v2210 = vpop.xlane.xlu0 %2209
    %v2211 = vsel %vm2204, %v1815, -inf
    %2212 = vmax.xlane.f32.xlu0 %v2211
    %v2213 = vpop.xlane.xlu0 %2212
    %v2214 = vsel %vm2204, %v1893, -inf
    %2215 = vmax.xlane.f32.xlu0 %v2214
    %v2216 = vpop.xlane.xlu0 %2215
    %v2217 = vsel %vm2204, %v1969, -inf
    %2218 = vmax.xlane.f32.xlu0 %v2217
    %v2219 = vpop.xlane.xlu0 %2218
    %v2220 = vsel %vm2204, %v2047, -inf
    %2221 = vmax.xlane.f32.xlu0 %v2220
    %v2222 = vpop.xlane.xlu0 %2221
    %v2223 = vsel %vm2204, %v2123, -inf
    %2224 = vmax.xlane.f32.xlu0 %v2223
    %v2225 = vpop.xlane.xlu0 %2224
    %v2226 = vsel %vm2204, %v2201, -inf
    %2227 = vmax.xlane.f32.xlu0 %v2226
    %v2228 = vpop.xlane.xlu0 %2227
    %v2229 = vsub.f32 %v1661, %v2207
    %v2230 = vsub.f32 %v1739, %v2210
    %v2231 = vsub.f32 %v1815, %v2213
    %v2232 = vsub.f32 %v1893, %v2216
    %v2233 = vsub.f32 %v1969, %v2219
    %v2234 = vsub.f32 %v2047, %v2222
    %v2235 = vsub.f32 %v2123, %v2225
    %v2236 = vsub.f32 %v2201, %v2228
    %v2237 = vmul.f32 %v2229, 1.442695
    %v2238 = vpow.pop %v2237
    %v2239 = vmul.f32 %v2230, 1.442695
    %v2240 = vpow.pop %v2239
    %v2241 = vmul.f32 %v2231, 1.442695
    %v2242 = vpow.pop %v2241
    %v2243 = vmul.f32 %v2232, 1.442695
    %v2244 = vpow.pop %v2243
    %v2245 = vmul.f32 %v2233, 1.442695
    %v2246 = vpow.pop %v2245
    %v2247 = vmul.f32 %v2234, 1.442695
    %v2248 = vpow.pop %v2247
    %v2249 = vmul.f32 %v2235, 1.442695
    %v2250 = vpow.pop %v2249
    %v2251 = vmul.f32 %v2236, 1.442695
    %v2252 = vpow.pop %v2251
    %v2253 = vsel %vm2204, %v2238, 0.0
    %2254 = vadd.xlane.f32.xlu0 %v2253
    %v2255 = vpop.xlane.xlu0 %2254
    %v2256 = vsel %vm2204, %v2240, 0.0
    %2257 = vadd.xlane.f32.xlu0 %v2256
    %v2258 = vpop.xlane.xlu0 %2257
    %v2259 = vsel %vm2204, %v2242, 0.0
    %2260 = vadd.xlane.f32.xlu0 %v2259
    %v2261 = vpop.xlane.xlu0 %2260
    %v2262 = vsel %vm2204, %v2244, 0.0
    %2263 = vadd.xlane.f32.xlu0 %v2262
    %v2264 = vpop.xlane.xlu0 %2263
    %v2265 = vsel %vm2204, %v2246, 0.0
    %2266 = vadd.xlane.f32.xlu0 %v2265
    %v2267 = vpop.xlane.xlu0 %2266
    %v2268 = vsel %vm2204, %v2248, 0.0
    %2269 = vadd.xlane.f32.xlu0 %v2268
    %v2270 = vpop.xlane.xlu0 %2269
    %v2271 = vsel %vm2204, %v2250, 0.0
    %2272 = vadd.xlane.f32.xlu0 %v2271
    %v2273 = vpop.xlane.xlu0 %2272
    %v2274 = vsel %vm2204, %v2252, 0.0
    %2275 = vadd.xlane.f32.xlu0 %v2274
    %v2276 = vpop.xlane.xlu0 %2275
    %v2277 = vrcp.pop %v2255
    %v2278 = vrcp.pop %v2258
    %v2279 = vrcp.pop %v2261
    %v2280 = vrcp.pop %v2264
    %v2281 = vrcp.pop %v2267
    %v2282 = vrcp.pop %v2270
    %v2283 = vrcp.pop %v2273
    %v2284 = vrcp.pop %v2276
    %v2285 = vmul.f32 %v2238, %v2277
    %v2286 = vmul.f32 %v2240, %v2278
    %v2287 = vmul.f32 %v2242, %v2279
    %v2288 = vmul.f32 %v2244, %v2280
    %v2289 = vmul.f32 %v2246, %v2281
    %v2290 = vmul.f32 %v2248, %v2282
    %v2291 = vmul.f32 %v2250, %v2283
    %v2292 = vmul.f32 %v2252, %v2284
    %v2293 = vpack.c.bf16 %v2286, %v2285
    %v2294 = vpack.c.bf16 %v2288, %v2287
    %v2295 = vpack.c.bf16 %v2290, %v2289
    %v2296 = vpack.c.bf16 %v2292, %v2291
    %v2298 = vsel %vm2204, %v2293, 0
    %vm2300 = vcmask 1043456
    %v2302 = vsel %vm2300, %v1583, 0
    %2304 = vmatprep.subr.bf16.mxu0 0
    %2305 = vmatpush1.bf16.msra.mxu0 %v2302
    %2306 = vmatprep.subr.bf16.mxu0 0
    %2307 = vmatpush1.bf16.msra.mxu0 0
    %2308 = vmatprep.subr.bf16.mxu0 0
    %2309 = vmatpush1.bf16.msra.mxu0 0
    %2310 = vmatprep.subr.bf16.mxu0 0
    %2311 = vmatpush1.bf16.msra.mxu0 0
    %2312 = vmatprep.subr.bf16.mxu0 0
    %2313 = vmatpush1.bf16.msra.mxu0 0
    %2314 = vmatprep.subr.bf16.mxu0 0
    %2315 = vmatpush1.bf16.msra.mxu0 0
    %2316 = vmatprep.subr.bf16.mxu0 0
    %2317 = vmatpush1.bf16.msra.mxu0 0
    %2318 = vmatprep.subr.bf16.mxu0 0
    %2319 = vmatpush1.bf16.msra.mxu0 0
    %2320 = vmatprep.subr.bf16.mxu0 0
    %2321 = vmatpush1.bf16.msra.mxu0 0
    %2322 = vmatprep.subr.bf16.mxu0 0
    %2323 = vmatpush1.bf16.msra.mxu0 0
    %2324 = vmatprep.subr.bf16.mxu0 0
    %2325 = vmatpush1.bf16.msra.mxu0 0
    %2326 = vmatprep.subr.bf16.mxu0 0
    %2327 = vmatpush1.bf16.msra.mxu0 0
    %2328 = vmatprep.subr.bf16.mxu0 0
    %2329 = vmatpush1.bf16.msra.mxu0 0
    %2330 = vmatprep.subr.bf16.mxu0 0
    %2331 = vmatpush1.bf16.msra.mxu0 0
    %2332 = vmatprep.subr.bf16.mxu0 0
    %2333 = vmatpush1.bf16.msra.mxu0 0
    %2334 = vmatprep.subr.bf16.mxu0 0
    %2335 = vmatpush1.bf16.msra.mxu0 0
    %2336 = vmatprep.mubr.bf16.mxu0 0
    %2337 = vmatmul.mubr.bf16.gmra.mrb[0].mxu0 %v2298
    %v2338 = vpop.f32.mrb[0].mxu0
    %v2339 = vadd.f32 0.0, %v2338
    %v2340 = vpop.f32.mrb[0].mxu0
    %v2341 = vpop.f32.mrb[0].mxu0
    %v2342 = vpop.f32.mrb[0].mxu0
    %2343 = vdwg.mxu0
    %v2344 = vpack.c.bf16 %v2339, %v2339
    %v2346 = vrot.slane %v2293, 4
    %2348 = vrot.lane.b32.xlu0 %v1583, 64
    %v2349 = vpop.permute.xlu0 %2348
    %v2351 = vsel %vm2204, %v2346, 0
    %v2354 = vsel %vm2300, %v2349, 0
    %2356 = vmatprep.subr.bf16.mxu0 0
    %2357 = vmatpush1.bf16.msra.mxu0 %v2354
    %2358 = vmatprep.subr.bf16.mxu0 0
    %2359 = vmatpush1.bf16.msra.mxu0 0
    %2360 = vmatprep.subr.bf16.mxu0 0
    %2361 = vmatpush1.bf16.msra.mxu0 0
    %2362 = vmatprep.subr.bf16.mxu0 0
    %2363 = vmatpush1.bf16.msra.mxu0 0
    %2364 = vmatprep.subr.bf16.mxu0 0
    %2365 = vmatpush1.bf16.msra.mxu0 0
    %2366 = vmatprep.subr.bf16.mxu0 0
    %2367 = vmatpush1.bf16.msra.mxu0 0
    %2368 = vmatprep.subr.bf16.mxu0 0
    %2369 = vmatpush1.bf16.msra.mxu0 0
    %2370 = vmatprep.subr.bf16.mxu0 0
    %2371 = vmatpush1.bf16.msra.mxu0 0
    %2372 = vmatprep.subr.bf16.mxu0 0
    %2373 = vmatpush1.bf16.msra.mxu0 0
    %2374 = vmatprep.subr.bf16.mxu0 0
    %2375 = vmatpush1.bf16.msra.mxu0 0
    %2376 = vmatprep.subr.bf16.mxu0 0
    %2377 = vmatpush1.bf16.msra.mxu0 0
    %2378 = vmatprep.subr.bf16.mxu0 0
    %2379 = vmatpush1.bf16.msra.mxu0 0
    %2380 = vmatprep.subr.bf16.mxu0 0
    %2381 = vmatpush1.bf16.msra.mxu0 0
    %2382 = vmatprep.subr.bf16.mxu0 0
    %2383 = vmatpush1.bf16.msra.mxu0 0
    %2384 = vmatprep.subr.bf16.mxu0 0
    %2385 = vmatpush1.bf16.msra.mxu0 0
    %2386 = vmatprep.subr.bf16.mxu0 0
    %2387 = vmatpush1.bf16.msra.mxu0 0
    %2388 = vmatprep.mubr.bf16.mxu0 0
    %2389 = vmatmul.mubr.bf16.gmra.mrb[0].mxu0 %v2351
    %v2390 = vpop.f32.mrb[0].mxu0
    %v2391 = vadd.f32 0.0, %v2390
    %v2392 = vpop.f32.mrb[0].mxu0
    %v2393 = vpop.f32.mrb[0].mxu0
    %v2394 = vpop.f32.mrb[0].mxu0
    %2395 = vdwg.mxu0
    %v2396 = vpack.c.bf16 %v2391, %v2391
    %v2398 = vsel %vm2204, %v2294, 0
    %v2401 = vsel %vm2300, %v1584, 0
    %2403 = vmatprep.subr.bf16.mxu0 0
    %2404 = vmatpush1.bf16.msra.mxu0 %v2401
    %2405 = vmatprep.subr.bf16.mxu0 0
    %2406 = vmatpush1.bf16.msra.mxu0 0
    %2407 = vmatprep.subr.bf16.mxu0 0
    %2408 = vmatpush1.bf16.msra.mxu0 0
    %2409 = vmatprep.subr.bf16.mxu0 0
    %2410 = vmatpush1.bf16.msra.mxu0 0
    %2411 = vmatprep.subr.bf16.mxu0 0
    %2412 = vmatpush1.bf16.msra.mxu0 0
    %2413 = vmatprep.subr.bf16.mxu0 0
    %2414 = vmatpush1.bf16.msra.mxu0 0
    %2415 = vmatprep.subr.bf16.mxu0 0
    %2416 = vmatpush1.bf16.msra.mxu0 0
    %2417 = vmatprep.subr.bf16.mxu0 0
    %2418 = vmatpush1.bf16.msra.mxu0 0
    %2419 = vmatprep.subr.bf16.mxu0 0
    %2420 = vmatpush1.bf16.msra.mxu0 0
    %2421 = vmatprep.subr.bf16.mxu0 0
    %2422 = vmatpush1.bf16.msra.mxu0 0
    %2423 = vmatprep.subr.bf16.mxu0 0
    %2424 = vmatpush1.bf16.msra.mxu0 0
    %2425 = vmatprep.subr.bf16.mxu0 0
    %2426 = vmatpush1.bf16.msra.mxu0 0
    %2427 = vmatprep.subr.bf16.mxu0 0
    %2428 = vmatpush1.bf16.msra.mxu0 0
    %2429 = vmatprep.subr.bf16.mxu0 0
    %2430 = vmatpush1.bf16.msra.mxu0 0
    %2431 = vmatprep.subr.bf16.mxu0 0
    %2432 = vmatpush1.bf16.msra.mxu0 0
    %2433 = vmatprep.subr.bf16.mxu0 0
    %2434 = vmatpush1.bf16.msra.mxu0 0
    %2435 = vmatprep.mubr.bf16.mxu0 0
    %2436 = vmatmul.mubr.bf16.gmra.mrb[0].mxu0 %v2398
    %v2437 = vpop.f32.mrb[0].mxu0
    %v2438 = vadd.f32 0.0, %v2437
    %v2439 = vpop.f32.mrb[0].mxu0
    %v2440 = vpop.f32.mrb[0].mxu0
    %v2441 = vpop.f32.mrb[0].mxu0
    %2442 = vdwg.mxu0
    %v2443 = vpack.c.bf16 %v2438, %v2438
    %v2445 = vrot.slane %v2294, 4
    %2447 = vrot.lane.b32.xlu0 %v1584, 64
    %v2448 = vpop.permute.xlu0 %2447
    %v2450 = vsel %vm2204, %v2445, 0
    %v2453 = vsel %vm2300, %v2448, 0
    %2455 = vmatprep.subr.bf16.mxu0 0
    %2456 = vmatpush1.bf16.msra.mxu0 %v2453
    %2457 = vmatprep.subr.bf16.mxu0 0
    %2458 = vmatpush1.bf16.msra.mxu0 0
    %2459 = vmatprep.subr.bf16.mxu0 0
    %2460 = vmatpush1.bf16.msra.mxu0 0
    %2461 = vmatprep.subr.bf16.mxu0 0
    %2462 = vmatpush1.bf16.msra.mxu0 0
    %2463 = vmatprep.subr.bf16.mxu0 0
    %2464 = vmatpush1.bf16.msra.mxu0 0
    %2465 = vmatprep.subr.bf16.mxu0 0
    %2466 = vmatpush1.bf16.msra.mxu0 0
    %2467 = vmatprep.subr.bf16.mxu0 0
    %2468 = vmatpush1.bf16.msra.mxu0 0
    %2469 = vmatprep.subr.bf16.mxu0 0
    %2470 = vmatpush1.bf16.msra.mxu0 0
    %2471 = vmatprep.subr.bf16.mxu0 0
    %2472 = vmatpush1.bf16.msra.mxu0 0
    %2473 = vmatprep.subr.bf16.mxu0 0
    %2474 = vmatpush1.bf16.msra.mxu0 0
    %2475 = vmatprep.subr.bf16.mxu0 0
    %2476 = vmatpush1.bf16.msra.mxu0 0
    %2477 = vmatprep.subr.bf16.mxu0 0
    %2478 = vmatpush1.bf16.msra.mxu0 0
    %2479 = vmatprep.subr.bf16.mxu0 0
    %2480 = vmatpush1.bf16.msra.mxu0 0
    %2481 = vmatprep.subr.bf16.mxu0 0
    %2482 = vmatpush1.bf16.msra.mxu0 0
    %2483 = vmatprep.subr.bf16.mxu0 0
    %2484 = vmatpush1.bf16.msra.mxu0 0
    %2485 = vmatprep.subr.bf16.mxu0 0
    %2486 = vmatpush1.bf16.msra.mxu0 0
    %2487 = vmatprep.mubr.bf16.mxu0 0
    %2488 = vmatmul.mubr.bf16.gmra.mrb[0].mxu0 %v2450
    %v2489 = vpop.f32.mrb[0].mxu0
    %v2490 = vadd.f32 0.0, %v2489
    %v2491 = vpop.f32.mrb[0].mxu0
    %v2492 = vpop.f32.mrb[0].mxu0
    %v2493 = vpop.f32.mrb[0].mxu0
    %2494 = vdwg.mxu0
    %v2495 = vpack.c.bf16 %v2490, %v2490
    %v2497 = vsel %vm2204, %v2295, 0
    %v2500 = vsel %vm2300, %v1585, 0
    %2502 = vmatprep.subr.bf16.mxu0 0
    %2503 = vmatpush1.bf16.msra.mxu0 %v2500
    %2504 = vmatprep.subr.bf16.mxu0 0
    %2505 = vmatpush1.bf16.msra.mxu0 0
    %2506 = vmatprep.subr.bf16.mxu0 0
    %2507 = vmatpush1.bf16.msra.mxu0 0
    %2508 = vmatprep.subr.bf16.mxu0 0
    %2509 = vmatpush1.bf16.msra.mxu0 0
    %2510 = vmatprep.subr.bf16.mxu0 0
    %2511 = vmatpush1.bf16.msra.mxu0 0
    %2512 = vmatprep.subr.bf16.mxu0 0
    %2513 = vmatpush1.bf16.msra.mxu0 0
    %2514 = vmatprep.subr.bf16.mxu0 0
    %2515 = vmatpush1.bf16.msra.mxu0 0
    %2516 = vmatprep.subr.bf16.mxu0 0
    %2517 = vmatpush1.bf16.msra.mxu0 0
    %2518 = vmatprep.subr.bf16.mxu0 0
    %2519 = vmatpush1.bf16.msra.mxu0 0
    %2520 = vmatprep.subr.bf16.mxu0 0
    %2521 = vmatpush1.bf16.msra.mxu0 0
    %2522 = vmatprep.subr.bf16.mxu0 0
    %2523 = vmatpush1.bf16.msra.mxu0 0
    %2524 = vmatprep.subr.bf16.mxu0 0
    %2525 = vmatpush1.bf16.msra.mxu0 0
    %2526 = vmatprep.subr.bf16.mxu0 0
    %2527 = vmatpush1.bf16.msra.mxu0 0
    %2528 = vmatprep.subr.bf16.mxu0 0
    %2529 = vmatpush1.bf16.msra.mxu0 0
    %2530 = vmatprep.subr.bf16.mxu0 0
    %2531 = vmatpush1.bf16.msra.mxu0 0
    %2532 = vmatprep.subr.bf16.mxu0 0
    %2533 = vmatpush1.bf16.msra.mxu0 0
    %2534 = vmatprep.mubr.bf16.mxu0 0
    %2535 = vmatmul.mubr.bf16.gmra.mrb[0].mxu0 %v2497
    %v2536 = vpop.f32.mrb[0].mxu0
    %v2537 = vadd.f32 0.0, %v2536
    %v2538 = vpop.f32.mrb[0].mxu0
    %v2539 = vpop.f32.mrb[0].mxu0
    %v2540 = vpop.f32.mrb[0].mxu0
    %2541 = vdwg.mxu0
    %v2542 = vpack.c.bf16 %v2537, %v2537
    %v2544 = vrot.slane %v2295, 4
    %2546 = vrot.lane.b32.xlu0 %v1585, 64
    %v2547 = vpop.permute.xlu0 %2546
    %v2549 = vsel %vm2204, %v2544, 0
    %v2552 = vsel %vm2300, %v2547, 0
    %2554 = vmatprep.subr.bf16.mxu0 0
    %2555 = vmatpush1.bf16.msra.mxu0 %v2552
    %2556 = vmatprep.subr.bf16.mxu0 0
    %2557 = vmatpush1.bf16.msra.mxu0 0
    %2558 = vmatprep.subr.bf16.mxu0 0
    %2559 = vmatpush1.bf16.msra.mxu0 0
    %2560 = vmatprep.subr.bf16.mxu0 0
    %2561 = vmatpush1.bf16.msra.mxu0 0
    %2562 = vmatprep.subr.bf16.mxu0 0
    %2563 = vmatpush1.bf16.msra.mxu0 0
    %2564 = vmatprep.subr.bf16.mxu0 0
    %2565 = vmatpush1.bf16.msra.mxu0 0
    %2566 = vmatprep.subr.bf16.mxu0 0
    %2567 = vmatpush1.bf16.msra.mxu0 0
    %2568 = vmatprep.subr.bf16.mxu0 0
    %2569 = vmatpush1.bf16.msra.mxu0 0
    %2570 = vmatprep.subr.bf16.mxu0 0
    %2571 = vmatpush1.bf16.msra.mxu0 0
    %2572 = vmatprep.subr.bf16.mxu0 0
    %2573 = vmatpush1.bf16.msra.mxu0 0
    %2574 = vmatprep.subr.bf16.mxu0 0
    %2575 = vmatpush1.bf16.msra.mxu0 0
    %2576 = vmatprep.subr.bf16.mxu0 0
    %2577 = vmatpush1.bf16.msra.mxu0 0
    %2578 = vmatprep.subr.bf16.mxu0 0
    %2579 = vmatpush1.bf16.msra.mxu0 0
    %2580 = vmatprep.subr.bf16.mxu0 0
    %2581 = vmatpush1.bf16.msra.mxu0 0
    %2582 = vmatprep.subr.bf16.mxu0 0
    %2583 = vmatpush1.bf16.msra.mxu0 0
    %2584 = vmatprep.subr.bf16.mxu0 0
    %2585 = vmatpush1.bf16.msra.mxu0 0
    %2586 = vmatprep.mubr.bf16.mxu0 0
    %2587 = vmatmul.mubr.bf16.gmra.mrb[0].mxu0 %v2549
    %v2588 = vpop.f32.mrb[0].mxu0
    %v2589 = vadd.f32 0.0, %v2588
    %v2590 = vpop.f32.mrb[0].mxu0
    %v2591 = vpop.f32.mrb[0].mxu0
    %v2592 = vpop.f32.mrb[0].mxu0
    %2593 = vdwg.mxu0
    %v2594 = vpack.c.bf16 %v2589, %v2589
    %v2596 = vsel %vm2204, %v2296, 0
    %v2599 = vsel %vm2300, %v1586, 0
    %2601 = vmatprep.subr.bf16.mxu0 0
    %2602 = vmatpush1.bf16.msra.mxu0 %v2599
    %2603 = vmatprep.subr.bf16.mxu0 0
    %2604 = vmatpush1.bf16.msra.mxu0 0
    %2605 = vmatprep.subr.bf16.mxu0 0
    %2606 = vmatpush1.bf16.msra.mxu0 0
    %2607 = vmatprep.subr.bf16.mxu0 0
    %2608 = vmatpush1.bf16.msra.mxu0 0
    %2609 = vmatprep.subr.bf16.mxu0 0
    %2610 = vmatpush1.bf16.msra.mxu0 0
    %2611 = vmatprep.subr.bf16.mxu0 0
    %2612 = vmatpush1.bf16.msra.mxu0 0
    %2613 = vmatprep.subr.bf16.mxu0 0
    %2614 = vmatpush1.bf16.msra.mxu0 0
    %2615 = vmatprep.subr.bf16.mxu0 0
    %2616 = vmatpush1.bf16.msra.mxu0 0
    %2617 = vmatprep.subr.bf16.mxu0 0
    %2618 = vmatpush1.bf16.msra.mxu0 0
    %2619 = vmatprep.subr.bf16.mxu0 0
    %2620 = vmatpush1.bf16.msra.mxu0 0
    %2621 = vmatprep.subr.bf16.mxu0 0
    %2622 = vmatpush1.bf16.msra.mxu0 0
    %2623 = vmatprep.subr.bf16.mxu0 0
    %2624 = vmatpush1.bf16.msra.mxu0 0
    %2625 = vmatprep.subr.bf16.mxu0 0
    %2626 = vmatpush1.bf16.msra.mxu0 0
    %2627 = vmatprep.subr.bf16.mxu0 0
    %2628 = vmatpush1.bf16.msra.mxu0 0
    %2629 = vmatprep.subr.bf16.mxu0 0
    %2630 = vmatpush1.bf16.msra.mxu0 0
    %2631 = vmatprep.subr.bf16.mxu0 0
    %2632 = vmatpush1.bf16.msra.mxu0 0
    %2633 = vmatprep.mubr.bf16.mxu0 0
    %2634 = vmatmul.mubr.bf16.gmra.mrb[0].mxu0 %v2596
    %v2635 = vpop.f32.mrb[0].mxu0
    %v2636 = vadd.f32 0.0, %v2635
    %v2637 = vpop.f32.mrb[0].mxu0
    %v2638 = vpop.f32.mrb[0].mxu0
    %v2639 = vpop.f32.mrb[0].mxu0
    %2640 = vdwg.mxu0
    %v2641 = vpack.c.bf16 %v2636, %v2636
    %v2643 = vrot.slane %v2296, 4
    %2645 = vrot.lane.b32.xlu0 %v1586, 64
    %v2646 = vpop.permute.xlu0 %2645
    %v2648 = vsel %vm2204, %v2643, 0
    %v2651 = vsel %vm2300, %v2646, 0
    %2653 = vmatprep.subr.bf16.mxu0 0
    %2654 = vmatpush1.bf16.msra.mxu0 %v2651
    %2655 = vmatprep.subr.bf16.mxu0 0
    %2656 = vmatpush1.bf16.msra.mxu0 0
    %2657 = vmatprep.subr.bf16.mxu0 0
    %2658 = vmatpush1.bf16.msra.mxu0 0
    %2659 = vmatprep.subr.bf16.mxu0 0
    %2660 = vmatpush1.bf16.msra.mxu0 0
    %2661 = vmatprep.subr.bf16.mxu0 0
    %2662 = vmatpush1.bf16.msra.mxu0 0
    %2663 = vmatprep.subr.bf16.mxu0 0
    %2664 = vmatpush1.bf16.msra.mxu0 0
    %2665 = vmatprep.subr.bf16.mxu0 0
    %2666 = vmatpush1.bf16.msra.mxu0 0
    %2667 = vmatprep.subr.bf16.mxu0 0
    %2668 = vmatpush1.bf16.msra.mxu0 0
    %2669 = vmatprep.subr.bf16.mxu0 0
    %2670 = vmatpush1.bf16.msra.mxu0 0
    %2671 = vmatprep.subr.bf16.mxu0 0
    %2672 = vmatpush1.bf16.msra.mxu0 0
    %2673 = vmatprep.subr.bf16.mxu0 0
    %2674 = vmatpush1.bf16.msra.mxu0 0
    %2675 = vmatprep.subr.bf16.mxu0 0
    %2676 = vmatpush1.bf16.msra.mxu0 0
    %2677 = vmatprep.subr.bf16.mxu0 0
    %2678 = vmatpush1.bf16.msra.mxu0 0
    %2679 = vmatprep.subr.bf16.mxu0 0
    %2680 = vmatpush1.bf16.msra.mxu0 0
    %2681 = vmatprep.subr.bf16.mxu0 0
    %2682 = vmatpush1.bf16.msra.mxu0 0
    %2683 = vmatprep.subr.bf16.mxu0 0
    %2684 = vmatpush1.bf16.msra.mxu0 0
    %2685 = vmatprep.mubr.bf16.mxu0 0
    %2686 = vmatmul.mubr.bf16.gmra.mrb[0].mxu0 %v2648
    %v2687 = vpop.f32.mrb[0].mxu0
    %v2688 = vadd.f32 0.0, %v2687
    %v2689 = vpop.f32.mrb[0].mxu0
    %v2690 = vpop.f32.mrb[0].mxu0
    %v2691 = vpop.f32.mrb[0].mxu0
    %2692 = vdwg.mxu0
    %v2693 = vpack.c.bf16 %v2688, %v2688
    %2695 = vrot.lane.b32.xlu0 %v2396, 64
    %v2696 = vpop.permute.xlu0 %2695
    %2698 = vrot.lane.b32.xlu0 %v2495, 64
    %v2699 = vpop.permute.xlu0 %2698
    %2701 = vrot.lane.b32.xlu0 %v2594, 64
    %v2702 = vpop.permute.xlu0 %2701
    %2704 = vrot.lane.b32.xlu0 %v2693, 64
    %v2705 = vpop.permute.xlu0 %2704
    %v2708 = vsel %vm1587, %v2344, %v2696
    %v2712 = vsel %vm1587, %v2443, %v2699
    %v2716 = vsel %vm1587, %v2542, %v2702
    %v2720 = vsel %vm1587, %v2641, %v2705
    %v2722 = vld [vmem:[#allocation8] sm:$0xff]
    %v2723 = vld [vmem:[#allocation8 + $0x8] sm:$0xff]
    %v2724 = vld [vmem:[#allocation8 + $0x10] sm:$0xff]
    %v2725 = vld [vmem:[#allocation8 + $0x18] sm:$0xff]
    %v2726 = vld [vmem:[#allocation8 + $0x20] sm:$0xff]
    %v2727 = vld [vmem:[#allocation8 + $0x28] sm:$0xff]
    %v2728 = vld [vmem:[#allocation8 + $0x30] sm:$0xff]
    %v2729 = vld [vmem:[#allocation8 + $0x38] sm:$0xff]
    %v2730 = vld [vmem:[#allocation8 + $0x40] sm:$0xff]
    %v2731 = vld [vmem:[#allocation8 + $0x48] sm:$0xff]
    %v2732 = vld [vmem:[#allocation8 + $0x50] sm:$0xff]
    %v2733 = vld [vmem:[#allocation8 + $0x58] sm:$0xff]
    %v2734 = vld [vmem:[#allocation8 + $0x60] sm:$0xff]
    %v2735 = vld [vmem:[#allocation8 + $0x68] sm:$0xff]
    %v2736 = vld [vmem:[#allocation8 + $0x70] sm:$0xff]
    %v2737 = vld [vmem:[#allocation8 + $0x78] sm:$0xff]
    %v2738 = vld [vmem:[#allocation8 + $0x80] sm:$0xff]
    %v2739 = vld [vmem:[#allocation8 + $0x88] sm:$0xff]
    %v2740 = vld [vmem:[#allocation8 + $0x90] sm:$0xff]
    %v2741 = vld [vmem:[#allocation8 + $0x98] sm:$0xff]
    %v2742 = vld [vmem:[#allocation8 + $0xa0] sm:$0xff]
    %v2743 = vld [vmem:[#allocation8 + $0xa8] sm:$0xff]
    %v2744 = vld [vmem:[#allocation8 + $0xb0] sm:$0xff]
    %v2745 = vld [vmem:[#allocation8 + $0xb8] sm:$0xff]
    %v2746 = vld [vmem:[#allocation8 + $0xc0] sm:$0xff]
    %v2747 = vld [vmem:[#allocation8 + $0xc8] sm:$0xff]
    %v2748 = vld [vmem:[#allocation8 + $0xd0] sm:$0xff]
    %v2749 = vld [vmem:[#allocation8 + $0xd8] sm:$0xff]
    %v2750 = vld [vmem:[#allocation8 + $0xe0] sm:$0xff]
    %v2751 = vld [vmem:[#allocation8 + $0xe8] sm:$0xff]
    %v2752 = vld [vmem:[#allocation8 + $0xf0] sm:$0xff]
    %v2753 = vld [vmem:[#allocation8 + $0xf8] sm:$0xff]
    %v2754 = vld [vmem:[#allocation8 + $0x100] sm:$0xff]
    %v2755 = vld [vmem:[#allocation8 + $0x108] sm:$0xff]
    %v2756 = vld [vmem:[#allocation8 + $0x110] sm:$0xff]
    %v2757 = vld [vmem:[#allocation8 + $0x118] sm:$0xff]
    %v2758 = vld [vmem:[#allocation8 + $0x120] sm:$0xff]
    %v2759 = vld [vmem:[#allocation8 + $0x128] sm:$0xff]
    %v2760 = vld [vmem:[#allocation8 + $0x130] sm:$0xff]
    %v2761 = vld [vmem:[#allocation8 + $0x138] sm:$0xff]
    %v2762 = vld [vmem:[#allocation8 + $0x140] sm:$0xff]
    %v2763 = vld [vmem:[#allocation8 + $0x148] sm:$0xff]
    %v2764 = vld [vmem:[#allocation8 + $0x150] sm:$0xff]
    %v2765 = vld [vmem:[#allocation8 + $0x158] sm:$0xff]
    %v2766 = vld [vmem:[#allocation8 + $0x160] sm:$0xff]
    %v2767 = vld [vmem:[#allocation8 + $0x168] sm:$0xff]
    %v2768 = vld [vmem:[#allocation8 + $0x170] sm:$0xff]
    %v2769 = vld [vmem:[#allocation8 + $0x178] sm:$0xff]
    %v2770 = vld [vmem:[#allocation8 + $0x180] sm:$0xff]
    %v2771 = vld [vmem:[#allocation8 + $0x188] sm:$0xff]
    %v2772 = vld [vmem:[#allocation8 + $0x190] sm:$0xff]
    %v2773 = vld [vmem:[#allocation8 + $0x198] sm:$0xff]
    %v2774 = vld [vmem:[#allocation8 + $0x1a0] sm:$0xff]
    %v2775 = vld [vmem:[#allocation8 + $0x1a8] sm:$0xff]
    %v2776 = vld [vmem:[#allocation8 + $0x1b0] sm:$0xff]
    %v2777 = vld [vmem:[#allocation8 + $0x1b8] sm:$0xff]
    %v2778 = vld [vmem:[#allocation8 + $0x1c0] sm:$0xff]
    %v2779 = vld [vmem:[#allocation8 + $0x1c8] sm:$0xff]
    %v2780 = vld [vmem:[#allocation8 + $0x1d0] sm:$0xff]
    %v2781 = vld [vmem:[#allocation8 + $0x1d8] sm:$0xff]
    %v2782 = vld [vmem:[#allocation8 + $0x1e0] sm:$0xff]
    %v2783 = vld [vmem:[#allocation8 + $0x1e8] sm:$0xff]
    %v2784 = vld [vmem:[#allocation8 + $0x1f0] sm:$0xff]
    %v2785 = vld [vmem:[#allocation8 + $0x1f8] sm:$0xff]
    %v2786 = vld [vmem:[%s10] sm:$0x3]
    %v2788 = vlaneseq
    %v2789 = vshrl.u32 %v2788, 7
    %v2790 = vsub.s32 0, %v2789
    %v2791 = vrot.slane %v2786, %v2790
    %v2792 = vlaneseq
    %v2793 = vshrl.u32 %v2792, 7
    %v2794 = vsub.s32 1, %v2793
    %v2795 = vrot.slane %v2786, %v2794
    %v2862 = vunpack.c.l.b16 %v2722
    %v2863 = vunpack.c.h.b16 %v2722
    %v2864 = vunpack.c.l.b16 %v2723
    %v2865 = vunpack.c.h.b16 %v2723
    %v2866 = vunpack.c.l.b16 %v2724
    %v2867 = vunpack.c.h.b16 %v2724
    %v2868 = vunpack.c.l.b16 %v2725
    %v2869 = vunpack.c.h.b16 %v2725
    %v2870 = vunpack.c.l.b16 %v2726
    %v2871 = vunpack.c.h.b16 %v2726
    %v2872 = vunpack.c.l.b16 %v2727
    %v2873 = vunpack.c.h.b16 %v2727
    %v2874 = vunpack.c.l.b16 %v2728
    %v2875 = vunpack.c.h.b16 %v2728
    %v2876 = vunpack.c.l.b16 %v2729
    %v2877 = vunpack.c.h.b16 %v2729
    %v2878 = vunpack.c.l.b16 %v2730
    %v2879 = vunpack.c.h.b16 %v2730
    %v2880 = vunpack.c.l.b16 %v2731
    %v2881 = vunpack.c.h.b16 %v2731
    %v2882 = vunpack.c.l.b16 %v2732
    %v2883 = vunpack.c.h.b16 %v2732
    %v2884 = vunpack.c.l.b16 %v2733
    %v2885 = vunpack.c.h.b16 %v2733
    %v2886 = vunpack.c.l.b16 %v2734
    %v2887 = vunpack.c.h.b16 %v2734
    %v2888 = vunpack.c.l.b16 %v2735
    %v2889 = vunpack.c.h.b16 %v2735
    %v2890 = vunpack.c.l.b16 %v2736
    %v2891 = vunpack.c.h.b16 %v2736
    %v2892 = vunpack.c.l.b16 %v2737
    %v2893 = vunpack.c.h.b16 %v2737
    %v2894 = vunpack.c.l.b16 %v2738
    %v2895 = vunpack.c.h.b16 %v2738
    %v2896 = vunpack.c.l.b16 %v2739
    %v2897 = vunpack.c.h.b16 %v2739
    %v2898 = vunpack.c.l.b16 %v2740
    %v2899 = vunpack.c.h.b16 %v2740
    %v2900 = vunpack.c.l.b16 %v2741
    %v2901 = vunpack.c.h.b16 %v2741
    %v2902 = vunpack.c.l.b16 %v2742
    %v2903 = vunpack.c.h.b16 %v2742
    %v2904 = vunpack.c.l.b16 %v2743
    %v2905 = vunpack.c.h.b16 %v2743
    %v2906 = vunpack.c.l.b16 %v2744
    %v2907 = vunpack.c.h.b16 %v2744
    %v2908 = vunpack.c.l.b16 %v2745
    %v2909 = vunpack.c.h.b16 %v2745
    %v2910 = vunpack.c.l.b16 %v2746
    %v2911 = vunpack.c.h.b16 %v2746
    %v2912 = vunpack.c.l.b16 %v2747
    %v2913 = vunpack.c.h.b16 %v2747
    %v2914 = vunpack.c.l.b16 %v2748
    %v2915 = vunpack.c.h.b16 %v2748
    %v2916 = vunpack.c.l.b16 %v2749
    %v2917 = vunpack.c.h.b16 %v2749
    %v2918 = vunpack.c.l.b16 %v2750
    %v2919 = vunpack.c.h.b16 %v2750
    %v2920 = vunpack.c.l.b16 %v2751
    %v2921 = vunpack.c.h.b16 %v2751
    %v2922 = vunpack.c.l.b16 %v2752
    %v2923 = vunpack.c.h.b16 %v2752
    %v2924 = vunpack.c.l.b16 %v2753
    %v2925 = vunpack.c.h.b16 %v2753
    %v2926 = vunpack.c.l.b16 %v2754
    %v2927 = vunpack.c.h.b16 %v2754
    %v2928 = vunpack.c.l.b16 %v2755
    %v2929 = vunpack.c.h.b16 %v2755
    %v2930 = vunpack.c.l.b16 %v2756
    %v2931 = vunpack.c.h.b16 %v2756
    %v2932 = vunpack.c.l.b16 %v2757
    %v2933 = vunpack.c.h.b16 %v2757
    %v2934 = vunpack.c.l.b16 %v2758
    %v2935 = vunpack.c.h.b16 %v2758
    %v2936 = vunpack.c.l.b16 %v2759
    %v2937 = vunpack.c.h.b16 %v2759
    %v2938 = vunpack.c.l.b16 %v2760
    %v2939 = vunpack.c.h.b16 %v2760
    %v2940 = vunpack.c.l.b16 %v2761
    %v2941 = vunpack.c.h.b16 %v2761
    %v2942 = vunpack.c.l.b16 %v2762
    %v2943 = vunpack.c.h.b16 %v2762
    %v2944 = vunpack.c.l.b16 %v2763
    %v2945 = vunpack.c.h.b16 %v2763
    %v2946 = vunpack.c.l.b16 %v2764
    %v2947 = vunpack.c.h.b16 %v2764
    %v2948 = vunpack.c.l.b16 %v2765
    %v2949 = vunpack.c.h.b16 %v2765
    %v2950 = vunpack.c.l.b16 %v2766
    %v2951 = vunpack.c.h.b16 %v2766
    %v2952 = vunpack.c.l.b16 %v2767
    %v2953 = vunpack.c.h.b16 %v2767
    %v2954 = vunpack.c.l.b16 %v2768
    %v2955 = vunpack.c.h.b16 %v2768
    %v2956 = vunpack.c.l.b16 %v2769
    %v2957 = vunpack.c.h.b16 %v2769
    %v2958 = vunpack.c.l.b16 %v2770
    %v2959 = vunpack.c.h.b16 %v2770
    %v2960 = vunpack.c.l.b16 %v2771
    %v2961 = vunpack.c.h.b16 %v2771
    %v2962 = vunpack.c.l.b16 %v2772
    %v2963 = vunpack.c.h.b16 %v2772
    %v2964 = vunpack.c.l.b16 %v2773
    %v2965 = vunpack.c.h.b16 %v2773
    %v2966 = vunpack.c.l.b16 %v2774
    %v2967 = vunpack.c.h.b16 %v2774
    %v2968 = vunpack.c.l.b16 %v2775
    %v2969 = vunpack.c.h.b16 %v2775
    %v2970 = vunpack.c.l.b16 %v2776
    %v2971 = vunpack.c.h.b16 %v2776
    %v2972 = vunpack.c.l.b16 %v2777
    %v2973 = vunpack.c.h.b16 %v2777
    %v2974 = vunpack.c.l.b16 %v2778
    %v2975 = vunpack.c.h.b16 %v2778
    %v2976 = vunpack.c.l.b16 %v2779
    %v2977 = vunpack.c.h.b16 %v2779
    %v2978 = vunpack.c.l.b16 %v2780
    %v2979 = vunpack.c.h.b16 %v2780
    %v2980 = vunpack.c.l.b16 %v2781
    %v2981 = vunpack.c.h.b16 %v2781
    %v2982 = vunpack.c.l.b16 %v2782
    %v2983 = vunpack.c.h.b16 %v2782
    %v2984 = vunpack.c.l.b16 %v2783
    %v2985 = vunpack.c.h.b16 %v2783
    %v2986 = vunpack.c.l.b16 %v2784
    %v2987 = vunpack.c.h.b16 %v2784
    %v2988 = vunpack.c.l.b16 %v2785
    %v2989 = vunpack.c.h.b16 %v2785
    %v2990 = vpack.c.b16 %v2864, %v2862
    %v2991 = vpack.c.b16 %v2865, %v2863
    %v2992 = vpack.c.b16 %v2868, %v2866
    %v2993 = vpack.c.b16 %v2869, %v2867
    %v2994 = vpack.c.b16 %v2872, %v2870
    %v2995 = vpack.c.b16 %v2873, %v2871
    %v2996 = vpack.c.b16 %v2876, %v2874
    %v2997 = vpack.c.b16 %v2877, %v2875
    %v2998 = vpack.c.b16 %v2880, %v2878
    %v2999 = vpack.c.b16 %v2881, %v2879
    %v3000 = vpack.c.b16 %v2884, %v2882
    %v3001 = vpack.c.b16 %v2885, %v2883
    %v3002 = vpack.c.b16 %v2888, %v2886
    %v3003 = vpack.c.b16 %v2889, %v2887
    %v3004 = vpack.c.b16 %v2892, %v2890
    %v3005 = vpack.c.b16 %v2893, %v2891
    %v3006 = vpack.c.b16 %v2896, %v2894
    %v3007 = vpack.c.b16 %v2897, %v2895
    %v3008 = vpack.c.b16 %v2900, %v2898
    %v3009 = vpack.c.b16 %v2901, %v2899
    %v3010 = vpack.c.b16 %v2904, %v2902
    %v3011 = vpack.c.b16 %v2905, %v2903
    %v3012 = vpack.c.b16 %v2908, %v2906
    %v3013 = vpack.c.b16 %v2909, %v2907
    %v3014 = vpack.c.b16 %v2912, %v2910
    %v3015 = vpack.c.b16 %v2913, %v2911
    %v3016 = vpack.c.b16 %v2916, %v2914
    %v3017 = vpack.c.b16 %v2917, %v2915
    %v3018 = vpack.c.b16 %v2920, %v2918
    %v3019 = vpack.c.b16 %v2921, %v2919
    %v3020 = vpack.c.b16 %v2924, %v2922
    %v3021 = vpack.c.b16 %v2925, %v2923
    %v3022 = vpack.c.b16 %v2928, %v2926
    %v3023 = vpack.c.b16 %v2929, %v2927
    %v3024 = vpack.c.b16 %v2932, %v2930
    %v3025 = vpack.c.b16 %v2933, %v2931
    %v3026 = vpack.c.b16 %v2936, %v2934
    %v3027 = vpack.c.b16 %v2937, %v2935
    %v3028 = vpack.c.b16 %v2940, %v2938
    %v3029 = vpack.c.b16 %v2941, %v2939
    %v3030 = vpack.c.b16 %v2944, %v2942
    %v3031 = vpack.c.b16 %v2945, %v2943
    %v3032 = vpack.c.b16 %v2948, %v2946
    %v3033 = vpack.c.b16 %v2949, %v2947
    %v3034 = vpack.c.b16 %v2952, %v2950
    %v3035 = vpack.c.b16 %v2953, %v2951
    %v3036 = vpack.c.b16 %v2956, %v2954
    %v3037 = vpack.c.b16 %v2957, %v2955
    %v3038 = vpack.c.b16 %v2960, %v2958
    %v3039 = vpack.c.b16 %v2961, %v2959
    %v3040 = vpack.c.b16 %v2964, %v2962
    %v3041 = vpack.c.b16 %v2965, %v2963
    %v3042 = vpack.c.b16 %v2968, %v2966
    %v3043 = vpack.c.b16 %v2969, %v2967
    %v3044 = vpack.c.b16 %v2972, %v2970
    %v3045 = vpack.c.b16 %v2973, %v2971
    %v3046 = vpack.c.b16 %v2976, %v2974
    %v3047 = vpack.c.b16 %v2977, %v2975
    %v3048 = vpack.c.b16 %v2980, %v2978
    %v3049 = vpack.c.b16 %v2981, %v2979
    %v3050 = vpack.c.b16 %v2984, %v2982
    %v3051 = vpack.c.b16 %v2985, %v2983
    %v3052 = vpack.c.b16 %v2988, %v2986
    %v3053 = vpack.c.b16 %v2989, %v2987
    %3118 = vmatprep.subr.bf16.mxu0 %v2991
    %3119 = vmatpush1.bf16.msra.mxu0 %v2990
    %3120 = vmatprep.subr.bf16.mxu0 %v2993
    %3121 = vmatpush1.bf16.msra.mxu0 %v2992
    %3122 = vmatprep.subr.bf16.mxu0 %v2995
    %3123 = vmatpush1.bf16.msra.mxu0 %v2994
    %3124 = vmatprep.subr.bf16.mxu0 %v2997
    %3125 = vmatpush1.bf16.msra.mxu0 %v2996
    %3126 = vmatprep.subr.bf16.mxu0 %v2999
    %3127 = vmatpush1.bf16.msra.mxu0 %v2998
    %3128 = vmatprep.subr.bf16.mxu0 %v3001
    %3129 = vmatpush1.bf16.msra.mxu0 %v3000
    %3130 = vmatprep.subr.bf16.mxu0 %v3003
    %3131 = vmatpush1.bf16.msra.mxu0 %v3002
    %3132 = vmatprep.subr.bf16.mxu0 %v3005
    %3133 = vmatpush1.bf16.msra.mxu0 %v3004
    %3134 = vmatprep.subr.bf16.mxu0 %v3007
    %3135 = vmatpush1.bf16.msra.mxu0 %v3006
    %3136 = vmatprep.subr.bf16.mxu0 %v3009
    %3137 = vmatpush1.bf16.msra.mxu0 %v3008
    %3138 = vmatprep.subr.bf16.mxu0 %v3011
    %3139 = vmatpush1.bf16.msra.mxu0 %v3010
    %3140 = vmatprep.subr.bf16.mxu0 %v3013
    %3141 = vmatpush1.bf16.msra.mxu0 %v3012
    %3142 = vmatprep.subr.bf16.mxu0 %v3015
    %3143 = vmatpush1.bf16.msra.mxu0 %v3014
    %3144 = vmatprep.subr.bf16.mxu0 %v3017
    %3145 = vmatpush1.bf16.msra.mxu0 %v3016
    %3146 = vmatprep.subr.bf16.mxu0 %v3019
    %3147 = vmatpush1.bf16.msra.mxu0 %v3018
    %3148 = vmatprep.subr.bf16.mxu0 %v3021
    %3149 = vmatpush1.bf16.msra.mxu0 %v3020
    %3150 = vmatprep.mubr.bf16.mxu0 %v2712
    %3151 = vmatmul.mubr.bf16.gmra.mrb[0].mxu0 %v2708
    %v3152 = vpop.f32.mrb[0].mxu0
    %v3153 = vadd.f32 %v2791, %v3152
    %v3154 = vpop.f32.mrb[0].mxu0
    %v3155 = vadd.f32 %v2795, %v3154
    %v3156 = vpop.f32.mrb[0].mxu0
    %v3157 = vpop.f32.mrb[0].mxu0
    %3158 = vdwg.mxu0
    %3159 = vmatprep.subr.bf16.mxu0 %v3023
    %3160 = vmatpush1.bf16.msra.mxu0 %v3022
    %3161 = vmatprep.subr.bf16.mxu0 %v3025
    %3162 = vmatpush1.bf16.msra.mxu0 %v3024
    %3163 = vmatprep.subr.bf16.mxu0 %v3027
    %3164 = vmatpush1.bf16.msra.mxu0 %v3026
    %3165 = vmatprep.subr.bf16.mxu0 %v3029
    %3166 = vmatpush1.bf16.msra.mxu0 %v3028
    %3167 = vmatprep.subr.bf16.mxu0 %v3031
    %3168 = vmatpush1.bf16.msra.mxu0 %v3030
    %3169 = vmatprep.subr.bf16.mxu0 %v3033
    %3170 = vmatpush1.bf16.msra.mxu0 %v3032
    %3171 = vmatprep.subr.bf16.mxu0 %v3035
    %3172 = vmatpush1.bf16.msra.mxu0 %v3034
    %3173 = vmatprep.subr.bf16.mxu0 %v3037
    %3174 = vmatpush1.bf16.msra.mxu0 %v3036
    %3175 = vmatprep.subr.bf16.mxu0 %v3039
    %3176 = vmatpush1.bf16.msra.mxu0 %v3038
    %3177 = vmatprep.subr.bf16.mxu0 %v3041
    %3178 = vmatpush1.bf16.msra.mxu0 %v3040
    %3179 = vmatprep.subr.bf16.mxu0 %v3043
    %3180 = vmatpush1.bf16.msra.mxu0 %v3042
    %3181 = vmatprep.subr.bf16.mxu0 %v3045
    %3182 = vmatpush1.bf16.msra.mxu0 %v3044
    %3183 = vmatprep.subr.bf16.mxu0 %v3047
    %3184 = vmatpush1.bf16.msra.mxu0 %v3046
    %3185 = vmatprep.subr.bf16.mxu0 %v3049
    %3186 = vmatpush1.bf16.msra.mxu0 %v3048
    %3187 = vmatprep.subr.bf16.mxu0 %v3051
    %3188 = vmatpush1.bf16.msra.mxu0 %v3050
    %3189 = vmatprep.subr.bf16.mxu0 %v3053
    %3190 = vmatpush1.bf16.msra.mxu0 %v3052
    %3191 = vmatprep.mubr.bf16.mxu0 %v2720
    %3192 = vmatmul.mubr.bf16.gmra.mrb[0].mxu0 %v2716
    %v3193 = vpop.f32.mrb[0].mxu0
    %v3194 = vadd.f32 %v3153, %v3193
    %v3195 = vpop.f32.mrb[0].mxu0
    %v3196 = vadd.f32 %v3155, %v3195
    %v3197 = vpop.f32.mrb[0].mxu0
    %v3198 = vpop.f32.mrb[0].mxu0
    %3199 = vdwg.mxu0
    %3200 = vst [vmem:[#allocation10] sm:$0xff] %v3194
    %3201 = vst [vmem:[#allocation10 + $0x8] sm:$0xff] %v3196
    // Predicated region
    $region62: #{multi_head_attention.1} parent=1 // pred_check
      _
    $region63: #{multi_head_attention.1} parent=1 // pred_check_branch
      %3203 = sbr.rel (0) target = $region65
    $region64: #{multi_head_attention.1} parent=1 // pred_region
      %s3205 = ssub.s32 256, 256
      %3206 = vsyncadd [#allocation4], %s3205
      %s3208 = sshll.u32 [#allocation10], 4
      %s3209 = int_to_ptr.vmem [resolvable:$true] %s3208
      %3211 = dma.vmem_to_hbm [thread:$0]  %s3209, 256, %s11, [#allocation4]
    $region65: #{multi_head_attention.1} parent=1 // pred_fallthru
      _
    // Predicated region
    $region66: #{multi_head_attention.1} parent=1 // pred_check
      _
    $region67: #{multi_head_attention.1} parent=1 // pred_check_branch
      %3213 = sbr.rel (0) target = $region69
    $region68: #{multi_head_attention.1} parent=1 // pred_region
      %3214 = dma.done [#allocation4], 256
    $region69: #{multi_head_attention.1} parent=1 // pred_fallthru
      _
    %3215 = vsyncpa [#allocation3], 1
    %3216 = vsyncpa [#allocation6], 1
    %3217 = vsyncpa [#allocation9], 1
    %3218 = vsyncpa [#allocation4], 1

</llo_original>
